<compile_context>
chip_gen: v6e
topology: v6e:2x2x1
jax: 0.10.0
libtpu: 0.0.40
codegen_flags: <defaults>
</compile_context>

<pallas_src>
import functools

import numpy as np
import jax
import jax.numpy as jnp
from jax import lax
from jax.experimental import pallas as pl
from jax.experimental.pallas import tpu as pltpu

_LANE = 128
_LOOKUP_BLK = 256      # ids per grid step in embed_lookup
_BAGS_PER_STEP = 8     # bags per grid step in batched_bag_mean
_QBLK = 128            # queries per grid step in nearest_template_idx
_VMEM_LIMIT = 32 * 1024 * 1024


def _round_up(x, m):
    return -(-x // m) * m


def _pad_lanes(x):
    """Pad the last (lane) dim of a 2-D f32 array up to a multiple of 128."""
    x = jnp.asarray(x, jnp.float32)
    _, d = x.shape
    d_pad = _round_up(d, _LANE)
    if d_pad == d:
        return x
    return jnp.pad(x, ((0, 0), (0, d_pad - d)))


# ---------------------------------------------------------------------------
# Kernel 1: blocked embedding lookup (nn.Embedding): out[i] = table[ids[i]].
# Template table (num_classes+1 rows) is tiny -> keep it VMEM-resident and
# gather a whole block of ids per grid step with an exact select-accumulate
# (0/1 mask FMA), avoiding per-row grid steps / per-row DMAs entirely.
# ---------------------------------------------------------------------------
def _embed_lookup_kernel(ids_ref, tbl_ref, out_ref):
    ids = ids_ref[...]                                          # (BLK, 1) int32
    t = tbl_ref.shape[0]
    if t <= 64:
        # Small table: fully unrolled static-row accumulate (exact, VPU only).
        acc = jnp.zeros(out_ref.shape, jnp.float32)
        for row in range(t):
            mask = (ids == row).astype(jnp.float32)             # (BLK, 1)
            acc = acc + mask * tbl_ref[pl.ds(row, 1), :]        # (BLK, D)
        out_ref[...] = acc
    else:
        out_ref[...] = jnp.zeros_like(out_ref)

        def body(row, carry):
            mask = (ids == row).astype(jnp.float32)
            out_ref[...] += mask * tbl_ref[pl.ds(row, 1), :]
            return carry

        lax.fori_loop(0, t, body, 0)


def embed_lookup(ids, table, blk=_LOOKUP_BLK):
    ids = jnp.asarray(ids, jnp.int32).reshape(-1)
    n = int(ids.shape[0])
    t, d = table.shape
    n_pad = _round_up(max(n, 1), blk)
    ids_col = jnp.zeros((n_pad, 1), jnp.int32).at[:n, 0].set(ids)
    out = pl.pallas_call(
        _embed_lookup_kernel,
        out_shape=jax.ShapeDtypeStruct((n_pad, d), jnp.float32),
        grid=(n_pad // blk,),
        in_specs=[pl.BlockSpec((blk, 1), lambda i: (i, 0)),
                  pl.BlockSpec((t, d), lambda i: (0, 0))],       # table resident
        out_specs=pl.BlockSpec((blk, d), lambda i: (i, 0)),
        compiler_params=pltpu.CompilerParams(
            dimension_semantics=("parallel",),
            vmem_limit_bytes=_VMEM_LIMIT),
    )(ids_col, table)
    return out[:n]


# ---------------------------------------------------------------------------
# Kernel 2: batched templateEmbedding ("bag mean" of token embeddings).
# grid=(Q_pad/8,): each step handles 8 bags; per bag an in-kernel fori_loop
# over its real token count does double-buffered (1, D) row DMAs from the HBM
# word table, accumulates in f32 and scales by the per-bag inverse length.
# Token ids / lengths / inverse lengths live in SMEM. Empty/padded bags -> 0.
# Token ids are assumed in-range (same contract as torch nn.Embedding).
# ---------------------------------------------------------------------------
def _bag_mean_kernel(lmax, bags_per_step, ids_ref, lens_ref, inv_ref, word_hbm,
                     out_ref, rowbuf, sem):
    g = pl.program_id(0)
    d = out_ref.shape[1]

    for b in range(bags_per_step):                     # static unroll over 8 bags
        q = g * bags_per_step + b
        n = lens_ref[q]
        base = q * lmax

        def fetch(l, slot, base=base):
            pltpu.make_async_copy(
                word_hbm.at[pl.ds(ids_ref[base + l], 1), :],
                rowbuf.at[slot], sem.at[slot]).start()

        @pl.when(n > 0)
        def _():
            fetch(0, 0)

        def body(l, acc, n=n, fetch=fetch):
            slot = l & 1
            pltpu.make_async_copy(word_hbm.at[pl.ds(0, 1), :],
                                  rowbuf.at[slot], sem.at[slot]).wait()

            @pl.when(l + 1 < n)
            def _():
                fetch(l + 1, 1 - slot)

            return acc + rowbuf[slot]

        acc = lax.fori_loop(0, n, body, jnp.zeros((1, d), jnp.float32))
        out_ref[pl.ds(b, 1), :] = acc * inv_ref[q]     # inv=0 for empty/pad bags


def batched_bag_mean(ids_flat, lens, inv, num_bags_pad, lmax, table,
                     bags_per_step=_BAGS_PER_STEP):
    _, d = table.shape
    kernel = functools.partial(_bag_mean_kernel, lmax, bags_per_step)
    return pl.pallas_call(
        kernel,
        out_shape=jax.ShapeDtypeStruct((num_bags_pad, d), jnp.float32),
        grid=(num_bags_pad // bags_per_step,),
        in_specs=[
            pl.BlockSpec(memory_space=pltpu.MemorySpace.SMEM),   # token ids (flat)
            pl.BlockSpec(memory_space=pltpu.MemorySpace.SMEM),   # per-bag lengths
            pl.BlockSpec(memory_space=pltpu.MemorySpace.SMEM),   # per-bag 1/len
            pl.BlockSpec(memory_space=pl.ANY),                   # word table in HBM
        ],
        out_specs=pl.BlockSpec((bags_per_step, d), lambda g: (g, 0)),
        scratch_shapes=[
            pltpu.VMEM((2, 1, d), jnp.float32),                  # double-buffered row
            pltpu.SemaphoreType.DMA((2,)),
        ],
        compiler_params=pltpu.CompilerParams(
            dimension_semantics=("parallel",),
            vmem_limit_bytes=_VMEM_LIMIT),
    )(ids_flat, lens, inv, table)


# ---------------------------------------------------------------------------
# Kernel 3: batched nearest template (cosine similarity + argmax).
# Templates are frozen, so their normalization/transpose is hoisted to
# __init__ (bf16, (D, T)); the kernel only normalizes the queries (rsqrt on
# the EUP), runs one bf16 MXU matmul and a fused first-argmax (int32 iota).
# Per-norm eps clamping matches torch's CosineSimilarity implementation.
# ---------------------------------------------------------------------------
def _nearest_template_kernel(tmpl_ref, qry_ref, idx_ref):
    q = qry_ref[...]                                            # (QBLK, D) f32
    sq = jnp.sum(q * q, axis=1, keepdims=True)                  # (QBLK, 1)
    inv_norm = lax.rsqrt(jnp.maximum(sq, 1e-12))                # max(||q||, 1e-6)
    q_hat = (q * inv_norm).astype(jnp.bfloat16)
    sims = jnp.dot(q_hat, tmpl_ref[...],
                   preferred_element_type=jnp.float32)          # (QBLK, T)
    t = sims.shape[1]
    m = jnp.max(sims, axis=1, keepdims=True)
    col = lax.broadcasted_iota(jnp.int32, sims.shape, 1)
    idx_ref[...] = jnp.min(jnp.where(sims >= m, col, t),
                           axis=1, keepdims=True)               # first max, int32


def nearest_template_idx(tmpl_hat_t, queries, qblk=_QBLK):
    d, t = tmpl_hat_t.shape
    nq = int(queries.shape[0])
    q_pad = _round_up(max(nq, 1), qblk)
    if q_pad != nq:
        queries = jnp.pad(queries, ((0, q_pad - nq), (0, 0)))
    out = pl.pallas_call(
        _nearest_template_kernel,
        out_shape=jax.ShapeDtypeStruct((q_pad, 1), jnp.int32),
        grid=(q_pad // qblk,),
        in_specs=[pl.BlockSpec((d, t), lambda i: (0, 0)),        # normalized templates
                  pl.BlockSpec((qblk, d), lambda i: (i, 0))],
        out_specs=pl.BlockSpec((qblk, 1), lambda i: (i, 0)),
        compiler_params=pltpu.CompilerParams(
            dimension_semantics=("parallel",),
            vmem_limit_bytes=_VMEM_LIMIT),
    )(tmpl_hat_t, queries)
    return out[:nq]


# ---------------------------------------------------------------------------
# Module port
# ---------------------------------------------------------------------------
class SemanticsNNEmbedding:
    def __init__(self, num_classes, n_dim, pretrain_matrix, training_tokens_id):
        self.n_dim = n_dim
        self.num_classes = num_classes
        self.nearest_template = {}
        # Frozen word table, lane-padded so every DMA row / vreg is lane-dense.
        self._word_pad = _pad_lanes(pretrain_matrix)
        tokens = [list(t) for t in training_tokens_id] + [[]]    # trailing "empty" row
        # One batched bag-mean pallas_call for ALL training templates at once.
        self._tmpl_pad = self._batched_template_embedding(tokens)   # (T+1, D_pad)
        self.template_embeddings = self._tmpl_pad[:, :n_dim]        # (T+1, n_dim)
        # Precompute normalized + transposed template matrix once (frozen),
        # stored in bf16 for the MXU similarity kernel.
        tmpl = self._tmpl_pad[:-1]
        norms = jnp.sqrt(jnp.sum(tmpl * tmpl, axis=1, keepdims=True))
        t_hat = tmpl / jnp.maximum(norms, 1e-6)
        self._tmpl_hat_t = jnp.asarray(t_hat.T, jnp.bfloat16)       # (D_pad, T)

    # ---- host-side glue ----------------------------------------------------
    def _batched_template_embedding(self, token_lists):
        """Pad ragged token lists and compute all bag means in one kernel call."""
        q = len(token_lists)
        q_pad = _round_up(max(q, 1), _BAGS_PER_STEP)
        lmax = max([len(tk) for tk in token_lists] + [1])
        ids = np.zeros((q_pad, lmax), np.int32)
        lens = np.zeros((q_pad,), np.int32)
        inv = np.zeros((q_pad,), np.float32)
        for i, toks in enumerate(token_lists):
            m = len(toks)
            lens[i] = m
            if m:
                ids[i, :m] = np.asarray(toks, np.int32)
                inv[i] = 1.0 / m
        out = batched_bag_mean(jnp.asarray(ids.reshape(-1)),
                               jnp.asarray(lens), jnp.asarray(inv),
                               q_pad, lmax, self._word_pad)
        return out[:q]

    def templateEmbedding(self, tokens_id):
        """Mean of token embeddings (zero vector for the empty template)."""
        return self._batched_template_embedding([list(tokens_id)])[0, :self.n_dim]

    def _resolve_nearest(self, keys, token_lists):
        """Batch-compute nearest-template ids for all (key, tokens) pairs."""
        queries = self._batched_template_embedding(token_lists)     # (Q, D_pad)
        idx = nearest_template_idx(self._tmpl_hat_t, queries)       # (Q, 1) int32
        idx_host = np.asarray(jax.device_get(idx))[:, 0]            # single host sync
        for key, i in zip(keys, idx_host):
            self.nearest_template[key] = int(i)

    def nearestTemplate(self, event_id, tokens_id):
        # TODO(synk): host-side dict caching kept in Python (no Pallas equivalent).
        if event_id not in self.nearest_template:
            self._resolve_nearest([event_id], [list(tokens_id)])
        return self.nearest_template.get(event_id)

    def forward(self, input_dict):
        batch_event_ids = input_dict['eventids']
        batch_tokens_id = input_dict['templates']

        # Pass 1: collect first-occurrence (key, tokens) pairs needing a
        # nearest-template lookup, in the order the original issues them.
        pending_keys, pending_tokens, queued = [], [], set()

        def queue(key, toks):
            if key not in self.nearest_template and key not in queued:
                queued.add(key)
                pending_keys.append(key)
                pending_tokens.append(list(toks))

        event_id = None
        for batch_ind, event_ids in enumerate(batch_event_ids):
            for ind, event_id in enumerate(event_ids):
                if self.num_classes < event_id:
                    queue(event_id, batch_tokens_id[batch_ind][ind])
        for batch_ind, next_event in enumerate(input_dict['next']):
            if self.num_classes < next_event['eventid']:
                # NOTE: faithfully reproduces the original code's use of the stale
                # `event_id` loop variable as the cache key.
                queue(event_id, next_event['template'])

        # Pass 2: one batched bag-mean + one similarity kernel + one host sync
        # for ALL pending unseen events.
        if pending_keys:
            self._resolve_nearest(pending_keys, pending_tokens)

        # Pass 3: apply the cache (same in-place rewrites as the original).
        event_id = None
        for batch_ind, event_ids in enumerate(batch_event_ids):
            for ind, event_id in enumerate(event_ids):
                if self.num_classes < event_id:
                    batch_event_ids[batch_ind][ind] = self.nearest_template[event_id]
        for batch_ind, next_event in enumerate(input_dict['next']):
            if self.num_classes < next_event['eventid']:
                input_dict['next'][batch_ind]['eventid'] = self.nearest_template.get(event_id)

        ids = jnp.asarray(batch_event_ids, jnp.int32)                # (B, S)
        b, s = ids.shape
        out_pad = embed_lookup(ids.reshape(-1), self._tmpl_pad)      # (B*S, D_pad)
        return out_pad[:, :self.n_dim].reshape(b, s, self.n_dim)

    __call__ = forward


# ---------------------------------------------------------------------------
if __name__ == "__main__":
    key = jax.random.PRNGKey(0)
    vocab_size, n_dim = 50, 32
    num_classes = 6   # valid template ids are 0..num_classes (incl. trailing empty row)

    pretrain_matrix = jax.random.normal(key, (vocab_size, n_dim), jnp.float32)

    training_tokens_id = [
        [1, 2, 3],
        [4, 5],
        [6, 7, 8, 9],
        [10, 11],
        [12],
        [13, 14, 15],
    ]

    model = SemanticsNNEmbedding(num_classes, n_dim, pretrain_matrix,
                                 training_tokens_id)

    # batch = 2, seq = 8; event ids > num_classes are "unseen" templates that get
    # remapped to the nearest known template via cosine similarity.
    input_dict = {
        'eventids': [
            [0, 1, 2, 10, 3, 6, 4, 12],
            [5, 9, 0, 1, 2, 3, 4, 5],
        ],
        'templates': [
            [[1, 2], [4], [6, 7], [2, 5, 9], [10], [13], [12, 1], [7, 8, 14]],
            [[13, 14], [3, 4, 6], [1], [5], [8, 9], [11], [12, 13], [15, 1]],
        ],
        'next': [
            {'eventid': 11, 'template': [2, 3, 4]},
            {'eventid': 1, 'template': [5, 6]},
        ],
    }

    out = model(input_dict)
    out = jax.block_until_ready(out)
    assert out.shape == (2, 8, n_dim), out.shape

    # Reference 1: template-embedding construction (pure JAX).
    def ref_template_embedding(toks):
        if len(toks) == 0:
            return jnp.zeros((n_dim,), jnp.float32)
        return jnp.mean(pretrain_matrix[jnp.asarray(toks, jnp.int32)], axis=0)

    ref_templates = jnp.stack(
        [ref_template_embedding(t) for t in training_tokens_id + [[]]])
    assert jnp.allclose(model.template_embeddings, ref_templates, atol=1e-5), \
        float(jnp.max(jnp.abs(model.template_embeddings - ref_templates)))

    # Reference 2: final (post-remap) embedding lookup (exact gather).
    ids = jnp.asarray(input_dict['eventids'], jnp.int32)
    ref = model.template_embeddings[ids]
    assert jnp.allclose(out, ref, atol=1e-5), float(jnp.max(jnp.abs(out - ref)))

    # Reference 3: nearest-template remap of one unseen event (id 10, tokens [2,5,9]).
    q_emb = ref_template_embedding([2, 5, 9])
    t = ref_templates[:-1]
    eps = 1e-6
    sims = (t @ q_emb) / (jnp.maximum(jnp.linalg.norm(t, axis=1), eps)
                          * jnp.maximum(jnp.linalg.norm(q_emb), eps))
    chosen = model.nearest_template[10]
    # bf16 MXU similarities may differ from the f32 reference by a few 1e-3.
    assert float(sims[chosen]) >= float(jnp.max(sims)) - 3e-2

    print("KERNEL_OK")
</pallas_src>

<mosaic_0001>
module attributes {stable_mosaic.version = 11 : i64} {
  func.func @_bag_mean_kernel(%arg0: i32, %arg1: memref<32xi32, #tpu.memory_space<smem>>, %arg2: memref<8xi32, #tpu.memory_space<smem>>, %arg3: memref<8xf32, #tpu.memory_space<smem>>, %arg4: memref<50x128xf32, #tpu.memory_space<any>>, %arg5: memref<8x128xf32, #tpu.memory_space<vmem>>, %arg6: memref<2x1x128xf32, #tpu.memory_space<vmem>>, %arg7: memref<2x!tpu.dma_semaphore, #tpu.memory_space<semaphore_mem>>) attributes {dimension_semantics = [#tpu.dimension_semantics<parallel>], iteration_bounds = array<i64: 1>, scalar_prefetch = 0 : i64, scratch_operands = 2 : i64, tpu.core_type = #tpu.core_type<tc>, window_params = [{transform_indices = @transform_0, window_bounds = array<i64: 32>}, {transform_indices = @transform_1, window_bounds = array<i64: 8>}, {transform_indices = @transform_2, window_bounds = array<i64: 8>}, {}, {transform_indices = @transform_4, window_bounds = array<i64: 8, 128>}]} {
    %c8_i32 = arith.constant 8 : i32
    %0 = arith.muli %arg0, %c8_i32 : i32
    %c0_i32 = arith.constant 0 : i32
    %1 = arith.addi %0, %c0_i32 : i32
    %2 = arith.index_cast %1 : i32 to index
    %3 = memref.load %arg2[%2] : memref<8xi32, #tpu.memory_space<smem>>
    %c4_i32 = arith.constant 4 : i32
    %4 = arith.muli %1, %c4_i32 : i32
    %c0_i32_0 = arith.constant 0 : i32
    %5 = arith.cmpi sgt, %3, %c0_i32_0 : i32
    %6 = arith.extui %5 : i1 to i32
    %c0_i32_1 = arith.constant 0 : i32
    %7 = arith.cmpi ne, %6, %c0_i32_1 : i32
    scf.if %7 {
      %c0_i32_62 = arith.constant 0 : i32
      %136 = arith.addi %4, %c0_i32_62 : i32
      %137 = arith.index_cast %136 : i32 to index
      %138 = memref.load %arg1[%137] : memref<32xi32, #tpu.memory_space<smem>>
      %c0_i32_63 = arith.constant 0 : i32
      %c0_i32_64 = arith.constant 0 : i32
      %c0_i32_65 = arith.constant 0 : i32
      %139 = tpu.memref_slice %arg4[%138, %c0_i32_65] : memref<50x128xf32, #tpu.memory_space<any>> -> memref<1x128xf32, #tpu.memory_space<any>>
      %c0_i32_66 = arith.constant 0 : i32
      %c0_i32_67 = arith.constant 0 : i32
      %140 = tpu.memref_slice %arg6[%c0_i32_63, %c0_i32_66, %c0_i32_67] : memref<2x1x128xf32, #tpu.memory_space<vmem>> -> memref<1x1x128xf32, #tpu.memory_space<vmem>>
      %141 = tpu.memref_squeeze %140 : memref<1x1x128xf32, #tpu.memory_space<vmem>> -> memref<1x128xf32, #tpu.memory_space<vmem>>
      %142 = tpu.memref_slice %arg7[%c0_i32_64] : memref<2x!tpu.dma_semaphore, #tpu.memory_space<semaphore_mem>> -> memref<1x!tpu.dma_semaphore, #tpu.memory_space<semaphore_mem>>
      %143 = tpu.memref_squeeze %142 : memref<1x!tpu.dma_semaphore, #tpu.memory_space<semaphore_mem>> -> memref<!tpu.dma_semaphore, #tpu.memory_space<semaphore_mem>>
      tpu.enqueue_dma source(%139 : memref<1x128xf32, #tpu.memory_space<any>>) target(%141 : memref<1x128xf32, #tpu.memory_space<vmem>>) target_semaphore(%143 : memref<!tpu.dma_semaphore, #tpu.memory_space<semaphore_mem>>)
    } else {
    }
    %cst = arith.constant 0.000000e+00 : f32
    %8 = vector.broadcast %cst : f32 to vector<1x128xf32>
    %c0_i32_2 = arith.constant 0 : i32
    %9 = arith.subi %3, %c0_i32_2 : i32
    %10 = arith.addi %c0_i32_2, %9 : i32
    %c1_i32 = arith.constant 1 : i32
    %11 = scf.for %arg8 = %c0_i32_2 to %10 step %c1_i32 iter_args(%arg9 = %8) -> (vector<1x128xf32>)  : i32 {
      %c1_i32_62 = arith.constant 1 : i32
      %136 = arith.andi %arg8, %c1_i32_62 : i32
      %c0_i32_63 = arith.constant 0 : i32
      %c0_i32_64 = arith.constant 0 : i32
      %137 = tpu.memref_slice %arg4[%c0_i32_63, %c0_i32_64] : memref<50x128xf32, #tpu.memory_space<any>> -> memref<1x128xf32, #tpu.memory_space<any>>
      %c0_i32_65 = arith.constant 0 : i32
      %c0_i32_66 = arith.constant 0 : i32
      %138 = tpu.memref_slice %arg6[%136, %c0_i32_65, %c0_i32_66] : memref<2x1x128xf32, #tpu.memory_space<vmem>> -> memref<1x1x128xf32, #tpu.memory_space<vmem>>
      %139 = tpu.memref_squeeze %138 : memref<1x1x128xf32, #tpu.memory_space<vmem>> -> memref<1x128xf32, #tpu.memory_space<vmem>>
      %140 = tpu.memref_slice %arg7[%136] : memref<2x!tpu.dma_semaphore, #tpu.memory_space<semaphore_mem>> -> memref<1x!tpu.dma_semaphore, #tpu.memory_space<semaphore_mem>>
      %141 = tpu.memref_squeeze %140 : memref<1x!tpu.dma_semaphore, #tpu.memory_space<semaphore_mem>> -> memref<!tpu.dma_semaphore, #tpu.memory_space<semaphore_mem>>
      tpu.wait_dma2 semaphore(%141 : memref<!tpu.dma_semaphore, #tpu.memory_space<semaphore_mem>>) src(%137 : memref<1x128xf32, #tpu.memory_space<any>>) dst(%139 : memref<1x128xf32, #tpu.memory_space<vmem>>)
      %c1_i32_67 = arith.constant 1 : i32
      %142 = arith.addi %arg8, %c1_i32_67 : i32
      %143 = arith.cmpi slt, %142, %3 : i32
      %144 = arith.extui %143 : i1 to i32
      %c0_i32_68 = arith.constant 0 : i32
      %145 = arith.cmpi ne, %144, %c0_i32_68 : i32
      scf.if %145 {
        %c1_i32_71 = arith.constant 1 : i32
        %150 = arith.addi %arg8, %c1_i32_71 : i32
        %c1_i32_72 = arith.constant 1 : i32
        %151 = arith.subi %c1_i32_72, %136 : i32
        %152 = arith.addi %4, %150 : i32
        %153 = arith.index_cast %152 : i32 to index
        %154 = memref.load %arg1[%153] : memref<32xi32, #tpu.memory_space<smem>>
        %c0_i32_73 = arith.constant 0 : i32
        %155 = tpu.memref_slice %arg4[%154, %c0_i32_73] : memref<50x128xf32, #tpu.memory_space<any>> -> memref<1x128xf32, #tpu.memory_space<any>>
        %c0_i32_74 = arith.constant 0 : i32
        %c0_i32_75 = arith.constant 0 : i32
        %156 = tpu.memref_slice %arg6[%151, %c0_i32_74, %c0_i32_75] : memref<2x1x128xf32, #tpu.memory_space<vmem>> -> memref<1x1x128xf32, #tpu.memory_space<vmem>>
        %157 = tpu.memref_squeeze %156 : memref<1x1x128xf32, #tpu.memory_space<vmem>> -> memref<1x128xf32, #tpu.memory_space<vmem>>
        %158 = tpu.memref_slice %arg7[%151] : memref<2x!tpu.dma_semaphore, #tpu.memory_space<semaphore_mem>> -> memref<1x!tpu.dma_semaphore, #tpu.memory_space<semaphore_mem>>
        %159 = tpu.memref_squeeze %158 : memref<1x!tpu.dma_semaphore, #tpu.memory_space<semaphore_mem>> -> memref<!tpu.dma_semaphore, #tpu.memory_space<semaphore_mem>>
        tpu.enqueue_dma source(%155 : memref<1x128xf32, #tpu.memory_space<any>>) target(%157 : memref<1x128xf32, #tpu.memory_space<vmem>>) target_semaphore(%159 : memref<!tpu.dma_semaphore, #tpu.memory_space<semaphore_mem>>)
      } else {
      }
      %146 = arith.index_cast %136 : i32 to index
      %c0_69 = arith.constant 0 : index
      %c0_70 = arith.constant 0 : index
      %147 = vector.load %arg6[%146, %c0_69, %c0_70] : memref<2x1x128xf32, #tpu.memory_space<vmem>>, vector<1x1x128xf32>
      %148 = vector.shape_cast %147 : vector<1x1x128xf32> to vector<1x128xf32>
      %149 = arith.addf %arg9, %148 : vector<1x128xf32>
      scf.yield %149 : vector<1x128xf32>
    }
    %12 = arith.index_cast %1 : i32 to index
    %13 = memref.load %arg3[%12] : memref<8xf32, #tpu.memory_space<smem>>
    %14 = vector.broadcast %13 : f32 to vector<1x128xf32>
    %15 = arith.mulf %11, %14 : vector<1x128xf32>
    %c0 = arith.constant 0 : index
    %c0_3 = arith.constant 0 : index
    %16 = vector.load %arg5[%c0, %c0_3] : memref<8x128xf32, #tpu.memory_space<vmem>>, vector<1x128xf32>
    tpu.vector_store %arg5[%c0, %c0_3], %15 {strides = array<i32>} : memref<8x128xf32, #tpu.memory_space<vmem>>, vector<1x128xf32>,
    %c8_i32_4 = arith.constant 8 : i32
    %17 = arith.muli %arg0, %c8_i32_4 : i32
    %c1_i32_5 = arith.constant 1 : i32
    %18 = arith.addi %17, %c1_i32_5 : i32
    %19 = arith.index_cast %18 : i32 to index
    %20 = memref.load %arg2[%19] : memref<8xi32, #tpu.memory_space<smem>>
    %c4_i32_6 = arith.constant 4 : i32
    %21 = arith.muli %18, %c4_i32_6 : i32
    %c0_i32_7 = arith.constant 0 : i32
    %22 = arith.cmpi sgt, %20, %c0_i32_7 : i32
    %23 = arith.extui %22 : i1 to i32
    %c0_i32_8 = arith.constant 0 : i32
    %24 = arith.cmpi ne, %23, %c0_i32_8 : i32
    scf.if %24 {
      %c0_i32_62 = arith.constant 0 : i32
      %136 = arith.addi %21, %c0_i32_62 : i32
      %137 = arith.index_cast %136 : i32 to index
      %138 = memref.load %arg1[%137] : memref<32xi32, #tpu.memory_space<smem>>
      %c0_i32_63 = arith.constant 0 : i32
      %c0_i32_64 = arith.constant 0 : i32
      %c0_i32_65 = arith.constant 0 : i32
      %139 = tpu.memref_slice %arg4[%138, %c0_i32_65] : memref<50x128xf32, #tpu.memory_space<any>> -> memref<1x128xf32, #tpu.memory_space<any>>
      %c0_i32_66 = arith.constant 0 : i32
      %c0_i32_67 = arith.constant 0 : i32
      %140 = tpu.memref_slice %arg6[%c0_i32_63, %c0_i32_66, %c0_i32_67] : memref<2x1x128xf32, #tpu.memory_space<vmem>> -> memref<1x1x128xf32, #tpu.memory_space<vmem>>
      %141 = tpu.memref_squeeze %140 : memref<1x1x128xf32, #tpu.memory_space<vmem>> -> memref<1x128xf32, #tpu.memory_space<vmem>>
      %142 = tpu.memref_slice %arg7[%c0_i32_64] : memref<2x!tpu.dma_semaphore, #tpu.memory_space<semaphore_mem>> -> memref<1x!tpu.dma_semaphore, #tpu.memory_space<semaphore_mem>>
      %143 = tpu.memref_squeeze %142 : memref<1x!tpu.dma_semaphore, #tpu.memory_space<semaphore_mem>> -> memref<!tpu.dma_semaphore, #tpu.memory_space<semaphore_mem>>
      tpu.enqueue_dma source(%139 : memref<1x128xf32, #tpu.memory_space<any>>) target(%141 : memref<1x128xf32, #tpu.memory_space<vmem>>) target_semaphore(%143 : memref<!tpu.dma_semaphore, #tpu.memory_space<semaphore_mem>>)
    } else {
    }
    %cst_9 = arith.constant 0.000000e+00 : f32
    %25 = vector.broadcast %cst_9 : f32 to vector<1x128xf32>
    %c0_i32_10 = arith.constant 0 : i32
    %26 = arith.subi %20, %c0_i32_10 : i32
    %27 = arith.addi %c0_i32_10, %26 : i32
    %c1_i32_11 = arith.constant 1 : i32
    %28 = scf.for %arg8 = %c0_i32_10 to %27 step %c1_i32_11 iter_args(%arg9 = %25) -> (vector<1x128xf32>)  : i32 {
      %c1_i32_62 = arith.constant 1 : i32
      %136 = arith.andi %arg8, %c1_i32_62 : i32
      %c0_i32_63 = arith.constant 0 : i32
      %c0_i32_64 = arith.constant 0 : i32
      %137 = tpu.memref_slice %arg4[%c0_i32_63, %c0_i32_64] : memref<50x128xf32, #tpu.memory_space<any>> -> memref<1x128xf32, #tpu.memory_space<any>>
      %c0_i32_65 = arith.constant 0 : i32
      %c0_i32_66 = arith.constant 0 : i32
      %138 = tpu.memref_slice %arg6[%136, %c0_i32_65, %c0_i32_66] : memref<2x1x128xf32, #tpu.memory_space<vmem>> -> memref<1x1x128xf32, #tpu.memory_space<vmem>>
      %139 = tpu.memref_squeeze %138 : memref<1x1x128xf32, #tpu.memory_space<vmem>> -> memref<1x128xf32, #tpu.memory_space<vmem>>
      %140 = tpu.memref_slice %arg7[%136] : memref<2x!tpu.dma_semaphore, #tpu.memory_space<semaphore_mem>> -> memref<1x!tpu.dma_semaphore, #tpu.memory_space<semaphore_mem>>
      %141 = tpu.memref_squeeze %140 : memref<1x!tpu.dma_semaphore, #tpu.memory_space<semaphore_mem>> -> memref<!tpu.dma_semaphore, #tpu.memory_space<semaphore_mem>>
      tpu.wait_dma2 semaphore(%141 : memref<!tpu.dma_semaphore, #tpu.memory_space<semaphore_mem>>) src(%137 : memref<1x128xf32, #tpu.memory_space<any>>) dst(%139 : memref<1x128xf32, #tpu.memory_space<vmem>>)
      %c1_i32_67 = arith.constant 1 : i32
      %142 = arith.addi %arg8, %c1_i32_67 : i32
      %143 = arith.cmpi slt, %142, %20 : i32
      %144 = arith.extui %143 : i1 to i32
      %c0_i32_68 = arith.constant 0 : i32
      %145 = arith.cmpi ne, %144, %c0_i32_68 : i32
      scf.if %145 {
        %c1_i32_71 = arith.constant 1 : i32
        %150 = arith.addi %arg8, %c1_i32_71 : i32
        %c1_i32_72 = arith.constant 1 : i32
        %151 = arith.subi %c1_i32_72, %136 : i32
        %152 = arith.addi %21, %150 : i32
        %153 = arith.index_cast %152 : i32 to index
        %154 = memref.load %arg1[%153] : memref<32xi32, #tpu.memory_space<smem>>
        %c0_i32_73 = arith.constant 0 : i32
        %155 = tpu.memref_slice %arg4[%154, %c0_i32_73] : memref<50x128xf32, #tpu.memory_space<any>> -> memref<1x128xf32, #tpu.memory_space<any>>
        %c0_i32_74 = arith.constant 0 : i32
        %c0_i32_75 = arith.constant 0 : i32
        %156 = tpu.memref_slice %arg6[%151, %c0_i32_74, %c0_i32_75] : memref<2x1x128xf32, #tpu.memory_space<vmem>> -> memref<1x1x128xf32, #tpu.memory_space<vmem>>
        %157 = tpu.memref_squeeze %156 : memref<1x1x128xf32, #tpu.memory_space<vmem>> -> memref<1x128xf32, #tpu.memory_space<vmem>>
        %158 = tpu.memref_slice %arg7[%151] : memref<2x!tpu.dma_semaphore, #tpu.memory_space<semaphore_mem>> -> memref<1x!tpu.dma_semaphore, #tpu.memory_space<semaphore_mem>>
        %159 = tpu.memref_squeeze %158 : memref<1x!tpu.dma_semaphore, #tpu.memory_space<semaphore_mem>> -> memref<!tpu.dma_semaphore, #tpu.memory_space<semaphore_mem>>
        tpu.enqueue_dma source(%155 : memref<1x128xf32, #tpu.memory_space<any>>) target(%157 : memref<1x128xf32, #tpu.memory_space<vmem>>) target_semaphore(%159 : memref<!tpu.dma_semaphore, #tpu.memory_space<semaphore_mem>>)
      } else {
      }
      %146 = arith.index_cast %136 : i32 to index
      %c0_69 = arith.constant 0 : index
      %c0_70 = arith.constant 0 : index
      %147 = vector.load %arg6[%146, %c0_69, %c0_70] : memref<2x1x128xf32, #tpu.memory_space<vmem>>, vector<1x1x128xf32>
      %148 = vector.shape_cast %147 : vector<1x1x128xf32> to vector<1x128xf32>
      %149 = arith.addf %arg9, %148 : vector<1x128xf32>
      scf.yield %149 : vector<1x128xf32>
    }
    %29 = arith.index_cast %18 : i32 to index
    %30 = memref.load %arg3[%29] : memref<8xf32, #tpu.memory_space<smem>>
    %31 = vector.broadcast %30 : f32 to vector<1x128xf32>
    %32 = arith.mulf %28, %31 : vector<1x128xf32>
    %c1 = arith.constant 1 : index
    %c0_12 = arith.constant 0 : index
    %33 = vector.load %arg5[%c1, %c0_12] : memref<8x128xf32, #tpu.memory_space<vmem>>, vector<1x128xf32>
    tpu.vector_store %arg5[%c1, %c0_12], %32 {strides = array<i32>} : memref<8x128xf32, #tpu.memory_space<vmem>>, vector<1x128xf32>,
    %c8_i32_13 = arith.constant 8 : i32
    %34 = arith.muli %arg0, %c8_i32_13 : i32
    %c2_i32 = arith.constant 2 : i32
    %35 = arith.addi %34, %c2_i32 : i32
    %36 = arith.index_cast %35 : i32 to index
    %37 = memref.load %arg2[%36] : memref<8xi32, #tpu.memory_space<smem>>
    %c4_i32_14 = arith.constant 4 : i32
    %38 = arith.muli %35, %c4_i32_14 : i32
    %c0_i32_15 = arith.constant 0 : i32
    %39 = arith.cmpi sgt, %37, %c0_i32_15 : i32
    %40 = arith.extui %39 : i1 to i32
    %c0_i32_16 = arith.constant 0 : i32
    %41 = arith.cmpi ne, %40, %c0_i32_16 : i32
    scf.if %41 {
      %c0_i32_62 = arith.constant 0 : i32
      %136 = arith.addi %38, %c0_i32_62 : i32
      %137 = arith.index_cast %136 : i32 to index
      %138 = memref.load %arg1[%137] : memref<32xi32, #tpu.memory_space<smem>>
      %c0_i32_63 = arith.constant 0 : i32
      %c0_i32_64 = arith.constant 0 : i32
      %c0_i32_65 = arith.constant 0 : i32
      %139 = tpu.memref_slice %arg4[%138, %c0_i32_65] : memref<50x128xf32, #tpu.memory_space<any>> -> memref<1x128xf32, #tpu.memory_space<any>>
      %c0_i32_66 = arith.constant 0 : i32
      %c0_i32_67 = arith.constant 0 : i32
      %140 = tpu.memref_slice %arg6[%c0_i32_63, %c0_i32_66, %c0_i32_67] : memref<2x1x128xf32, #tpu.memory_space<vmem>> -> memref<1x1x128xf32, #tpu.memory_space<vmem>>
      %141 = tpu.memref_squeeze %140 : memref<1x1x128xf32, #tpu.memory_space<vmem>> -> memref<1x128xf32, #tpu.memory_space<vmem>>
      %142 = tpu.memref_slice %arg7[%c0_i32_64] : memref<2x!tpu.dma_semaphore, #tpu.memory_space<semaphore_mem>> -> memref<1x!tpu.dma_semaphore, #tpu.memory_space<semaphore_mem>>
      %143 = tpu.memref_squeeze %142 : memref<1x!tpu.dma_semaphore, #tpu.memory_space<semaphore_mem>> -> memref<!tpu.dma_semaphore, #tpu.memory_space<semaphore_mem>>
      tpu.enqueue_dma source(%139 : memref<1x128xf32, #tpu.memory_space<any>>) target(%141 : memref<1x128xf32, #tpu.memory_space<vmem>>) target_semaphore(%143 : memref<!tpu.dma_semaphore, #tpu.memory_space<semaphore_mem>>)
    } else {
    }
    %cst_17 = arith.constant 0.000000e+00 : f32
    %42 = vector.broadcast %cst_17 : f32 to vector<1x128xf32>
    %c0_i32_18 = arith.constant 0 : i32
    %43 = arith.subi %37, %c0_i32_18 : i32
    %44 = arith.addi %c0_i32_18, %43 : i32
    %c1_i32_19 = arith.constant 1 : i32
    %45 = scf.for %arg8 = %c0_i32_18 to %44 step %c1_i32_19 iter_args(%arg9 = %42) -> (vector<1x128xf32>)  : i32 {
      %c1_i32_62 = arith.constant 1 : i32
      %136 = arith.andi %arg8, %c1_i32_62 : i32
      %c0_i32_63 = arith.constant 0 : i32
      %c0_i32_64 = arith.constant 0 : i32
      %137 = tpu.memref_slice %arg4[%c0_i32_63, %c0_i32_64] : memref<50x128xf32, #tpu.memory_space<any>> -> memref<1x128xf32, #tpu.memory_space<any>>
      %c0_i32_65 = arith.constant 0 : i32
      %c0_i32_66 = arith.constant 0 : i32
      %138 = tpu.memref_slice %arg6[%136, %c0_i32_65, %c0_i32_66] : memref<2x1x128xf32, #tpu.memory_space<vmem>> -> memref<1x1x128xf32, #tpu.memory_space<vmem>>
      %139 = tpu.memref_squeeze %138 : memref<1x1x128xf32, #tpu.memory_space<vmem>> -> memref<1x128xf32, #tpu.memory_space<vmem>>
      %140 = tpu.memref_slice %arg7[%136] : memref<2x!tpu.dma_semaphore, #tpu.memory_space<semaphore_mem>> -> memref<1x!tpu.dma_semaphore, #tpu.memory_space<semaphore_mem>>
      %141 = tpu.memref_squeeze %140 : memref<1x!tpu.dma_semaphore, #tpu.memory_space<semaphore_mem>> -> memref<!tpu.dma_semaphore, #tpu.memory_space<semaphore_mem>>
      tpu.wait_dma2 semaphore(%141 : memref<!tpu.dma_semaphore, #tpu.memory_space<semaphore_mem>>) src(%137 : memref<1x128xf32, #tpu.memory_space<any>>) dst(%139 : memref<1x128xf32, #tpu.memory_space<vmem>>)
      %c1_i32_67 = arith.constant 1 : i32
      %142 = arith.addi %arg8, %c1_i32_67 : i32
      %143 = arith.cmpi slt, %142, %37 : i32
      %144 = arith.extui %143 : i1 to i32
      %c0_i32_68 = arith.constant 0 : i32
      %145 = arith.cmpi ne, %144, %c0_i32_68 : i32
      scf.if %145 {
        %c1_i32_71 = arith.constant 1 : i32
        %150 = arith.addi %arg8, %c1_i32_71 : i32
        %c1_i32_72 = arith.constant 1 : i32
        %151 = arith.subi %c1_i32_72, %136 : i32
        %152 = arith.addi %38, %150 : i32
        %153 = arith.index_cast %152 : i32 to index
        %154 = memref.load %arg1[%153] : memref<32xi32, #tpu.memory_space<smem>>
        %c0_i32_73 = arith.constant 0 : i32
        %155 = tpu.memref_slice %arg4[%154, %c0_i32_73] : memref<50x128xf32, #tpu.memory_space<any>> -> memref<1x128xf32, #tpu.memory_space<any>>
        %c0_i32_74 = arith.constant 0 : i32
        %c0_i32_75 = arith.constant 0 : i32
        %156 = tpu.memref_slice %arg6[%151, %c0_i32_74, %c0_i32_75] : memref<2x1x128xf32, #tpu.memory_space<vmem>> -> memref<1x1x128xf32, #tpu.memory_space<vmem>>
        %157 = tpu.memref_squeeze %156 : memref<1x1x128xf32, #tpu.memory_space<vmem>> -> memref<1x128xf32, #tpu.memory_space<vmem>>
        %158 = tpu.memref_slice %arg7[%151] : memref<2x!tpu.dma_semaphore, #tpu.memory_space<semaphore_mem>> -> memref<1x!tpu.dma_semaphore, #tpu.memory_space<semaphore_mem>>
        %159 = tpu.memref_squeeze %158 : memref<1x!tpu.dma_semaphore, #tpu.memory_space<semaphore_mem>> -> memref<!tpu.dma_semaphore, #tpu.memory_space<semaphore_mem>>
        tpu.enqueue_dma source(%155 : memref<1x128xf32, #tpu.memory_space<any>>) target(%157 : memref<1x128xf32, #tpu.memory_space<vmem>>) target_semaphore(%159 : memref<!tpu.dma_semaphore, #tpu.memory_space<semaphore_mem>>)
      } else {
      }
      %146 = arith.index_cast %136 : i32 to index
      %c0_69 = arith.constant 0 : index
      %c0_70 = arith.constant 0 : index
      %147 = vector.load %arg6[%146, %c0_69, %c0_70] : memref<2x1x128xf32, #tpu.memory_space<vmem>>, vector<1x1x128xf32>
      %148 = vector.shape_cast %147 : vector<1x1x128xf32> to vector<1x128xf32>
      %149 = arith.addf %arg9, %148 : vector<1x128xf32>
      scf.yield %149 : vector<1x128xf32>
    }
    %46 = arith.index_cast %35 : i32 to index
    %47 = memref.load %arg3[%46] : memref<8xf32, #tpu.memory_space<smem>>
    %48 = vector.broadcast %47 : f32 to vector<1x128xf32>
    %49 = arith.mulf %45, %48 : vector<1x128xf32>
    %c2 = arith.constant 2 : index
    %c0_20 = arith.constant 0 : index
    %50 = vector.load %arg5[%c2, %c0_20] : memref<8x128xf32, #tpu.memory_space<vmem>>, vector<1x128xf32>
    tpu.vector_store %arg5[%c2, %c0_20], %49 {strides = array<i32>} : memref<8x128xf32, #tpu.memory_space<vmem>>, vector<1x128xf32>,
    %c8_i32_21 = arith.constant 8 : i32
    %51 = arith.muli %arg0, %c8_i32_21 : i32
    %c3_i32 = arith.constant 3 : i32
    %52 = arith.addi %51, %c3_i32 : i32
    %53 = arith.index_cast %52 : i32 to index
    %54 = memref.load %arg2[%53] : memref<8xi32, #tpu.memory_space<smem>>
    %c4_i32_22 = arith.constant 4 : i32
    %55 = arith.muli %52, %c4_i32_22 : i32
    %c0_i32_23 = arith.constant 0 : i32
    %56 = arith.cmpi sgt, %54, %c0_i32_23 : i32
    %57 = arith.extui %56 : i1 to i32
    %c0_i32_24 = arith.constant 0 : i32
    %58 = arith.cmpi ne, %57, %c0_i32_24 : i32
    scf.if %58 {
      %c0_i32_62 = arith.constant 0 : i32
      %136 = arith.addi %55, %c0_i32_62 : i32
      %137 = arith.index_cast %136 : i32 to index
      %138 = memref.load %arg1[%137] : memref<32xi32, #tpu.memory_space<smem>>
      %c0_i32_63 = arith.constant 0 : i32
      %c0_i32_64 = arith.constant 0 : i32
      %c0_i32_65 = arith.constant 0 : i32
      %139 = tpu.memref_slice %arg4[%138, %c0_i32_65] : memref<50x128xf32, #tpu.memory_space<any>> -> memref<1x128xf32, #tpu.memory_space<any>>
      %c0_i32_66 = arith.constant 0 : i32
      %c0_i32_67 = arith.constant 0 : i32
      %140 = tpu.memref_slice %arg6[%c0_i32_63, %c0_i32_66, %c0_i32_67] : memref<2x1x128xf32, #tpu.memory_space<vmem>> -> memref<1x1x128xf32, #tpu.memory_space<vmem>>
      %141 = tpu.memref_squeeze %140 : memref<1x1x128xf32, #tpu.memory_space<vmem>> -> memref<1x128xf32, #tpu.memory_space<vmem>>
      %142 = tpu.memref_slice %arg7[%c0_i32_64] : memref<2x!tpu.dma_semaphore, #tpu.memory_space<semaphore_mem>> -> memref<1x!tpu.dma_semaphore, #tpu.memory_space<semaphore_mem>>
      %143 = tpu.memref_squeeze %142 : memref<1x!tpu.dma_semaphore, #tpu.memory_space<semaphore_mem>> -> memref<!tpu.dma_semaphore, #tpu.memory_space<semaphore_mem>>
      tpu.enqueue_dma source(%139 : memref<1x128xf32, #tpu.memory_space<any>>) target(%141 : memref<1x128xf32, #tpu.memory_space<vmem>>) target_semaphore(%143 : memref<!tpu.dma_semaphore, #tpu.memory_space<semaphore_mem>>)
    } else {
    }
    %cst_25 = arith.constant 0.000000e+00 : f32
    %59 = vector.broadcast %cst_25 : f32 to vector<1x128xf32>
    %c0_i32_26 = arith.constant 0 : i32
    %60 = arith.subi %54, %c0_i32_26 : i32
    %61 = arith.addi %c0_i32_26, %60 : i32
    %c1_i32_27 = arith.constant 1 : i32
    %62 = scf.for %arg8 = %c0_i32_26 to %61 step %c1_i32_27 iter_args(%arg9 = %59) -> (vector<1x128xf32>)  : i32 {
      %c1_i32_62 = arith.constant 1 : i32
      %136 = arith.andi %arg8, %c1_i32_62 : i32
      %c0_i32_63 = arith.constant 0 : i32
      %c0_i32_64 = arith.constant 0 : i32
      %137 = tpu.memref_slice %arg4[%c0_i32_63, %c0_i32_64] : memref<50x128xf32, #tpu.memory_space<any>> -> memref<1x128xf32, #tpu.memory_space<any>>
      %c0_i32_65 = arith.constant 0 : i32
      %c0_i32_66 = arith.constant 0 : i32
      %138 = tpu.memref_slice %arg6[%136, %c0_i32_65, %c0_i32_66] : memref<2x1x128xf32, #tpu.memory_space<vmem>> -> memref<1x1x128xf32, #tpu.memory_space<vmem>>
      %139 = tpu.memref_squeeze %138 : memref<1x1x128xf32, #tpu.memory_space<vmem>> -> memref<1x128xf32, #tpu.memory_space<vmem>>
      %140 = tpu.memref_slice %arg7[%136] : memref<2x!tpu.dma_semaphore, #tpu.memory_space<semaphore_mem>> -> memref<1x!tpu.dma_semaphore, #tpu.memory_space<semaphore_mem>>
      %141 = tpu.memref_squeeze %140 : memref<1x!tpu.dma_semaphore, #tpu.memory_space<semaphore_mem>> -> memref<!tpu.dma_semaphore, #tpu.memory_space<semaphore_mem>>
      tpu.wait_dma2 semaphore(%141 : memref<!tpu.dma_semaphore, #tpu.memory_space<semaphore_mem>>) src(%137 : memref<1x128xf32, #tpu.memory_space<any>>) dst(%139 : memref<1x128xf32, #tpu.memory_space<vmem>>)
      %c1_i32_67 = arith.constant 1 : i32
      %142 = arith.addi %arg8, %c1_i32_67 : i32
      %143 = arith.cmpi slt, %142, %54 : i32
      %144 = arith.extui %143 : i1 to i32
      %c0_i32_68 = arith.constant 0 : i32
      %145 = arith.cmpi ne, %144, %c0_i32_68 : i32
      scf.if %145 {
        %c1_i32_71 = arith.constant 1 : i32
        %150 = arith.addi %arg8, %c1_i32_71 : i32
        %c1_i32_72 = arith.constant 1 : i32
        %151 = arith.subi %c1_i32_72, %136 : i32
        %152 = arith.addi %55, %150 : i32
        %153 = arith.index_cast %152 : i32 to index
        %154 = memref.load %arg1[%153] : memref<32xi32, #tpu.memory_space<smem>>
        %c0_i32_73 = arith.constant 0 : i32
        %155 = tpu.memref_slice %arg4[%154, %c0_i32_73] : memref<50x128xf32, #tpu.memory_space<any>> -> memref<1x128xf32, #tpu.memory_space<any>>
        %c0_i32_74 = arith.constant 0 : i32
        %c0_i32_75 = arith.constant 0 : i32
        %156 = tpu.memref_slice %arg6[%151, %c0_i32_74, %c0_i32_75] : memref<2x1x128xf32, #tpu.memory_space<vmem>> -> memref<1x1x128xf32, #tpu.memory_space<vmem>>
        %157 = tpu.memref_squeeze %156 : memref<1x1x128xf32, #tpu.memory_space<vmem>> -> memref<1x128xf32, #tpu.memory_space<vmem>>
        %158 = tpu.memref_slice %arg7[%151] : memref<2x!tpu.dma_semaphore, #tpu.memory_space<semaphore_mem>> -> memref<1x!tpu.dma_semaphore, #tpu.memory_space<semaphore_mem>>
        %159 = tpu.memref_squeeze %158 : memref<1x!tpu.dma_semaphore, #tpu.memory_space<semaphore_mem>> -> memref<!tpu.dma_semaphore, #tpu.memory_space<semaphore_mem>>
        tpu.enqueue_dma source(%155 : memref<1x128xf32, #tpu.memory_space<any>>) target(%157 : memref<1x128xf32, #tpu.memory_space<vmem>>) target_semaphore(%159 : memref<!tpu.dma_semaphore, #tpu.memory_space<semaphore_mem>>)
      } else {
      }
      %146 = arith.index_cast %136 : i32 to index
      %c0_69 = arith.constant 0 : index
      %c0_70 = arith.constant 0 : index
      %147 = vector.load %arg6[%146, %c0_69, %c0_70] : memref<2x1x128xf32, #tpu.memory_space<vmem>>, vector<1x1x128xf32>
      %148 = vector.shape_cast %147 : vector<1x1x128xf32> to vector<1x128xf32>
      %149 = arith.addf %arg9, %148 : vector<1x128xf32>
      scf.yield %149 : vector<1x128xf32>
    }
    %63 = arith.index_cast %52 : i32 to index
    %64 = memref.load %arg3[%63] : memref<8xf32, #tpu.memory_space<smem>>
    %65 = vector.broadcast %64 : f32 to vector<1x128xf32>
    %66 = arith.mulf %62, %65 : vector<1x128xf32>
    %c3 = arith.constant 3 : index
    %c0_28 = arith.constant 0 : index
    %67 = vector.load %arg5[%c3, %c0_28] : memref<8x128xf32, #tpu.memory_space<vmem>>, vector<1x128xf32>
    tpu.vector_store %arg5[%c3, %c0_28], %66 {strides = array<i32>} : memref<8x128xf32, #tpu.memory_space<vmem>>, vector<1x128xf32>,
    %c8_i32_29 = arith.constant 8 : i32
    %68 = arith.muli %arg0, %c8_i32_29 : i32
    %c4_i32_30 = arith.constant 4 : i32
    %69 = arith.addi %68, %c4_i32_30 : i32
    %70 = arith.index_cast %69 : i32 to index
    %71 = memref.load %arg2[%70] : memref<8xi32, #tpu.memory_space<smem>>
    %c4_i32_31 = arith.constant 4 : i32
    %72 = arith.muli %69, %c4_i32_31 : i32
    %c0_i32_32 = arith.constant 0 : i32
    %73 = arith.cmpi sgt, %71, %c0_i32_32 : i32
    %74 = arith.extui %73 : i1 to i32
    %c0_i32_33 = arith.constant 0 : i32
    %75 = arith.cmpi ne, %74, %c0_i32_33 : i32
    scf.if %75 {
      %c0_i32_62 = arith.constant 0 : i32
      %136 = arith.addi %72, %c0_i32_62 : i32
      %137 = arith.index_cast %136 : i32 to index
      %138 = memref.load %arg1[%137] : memref<32xi32, #tpu.memory_space<smem>>
      %c0_i32_63 = arith.constant 0 : i32
      %c0_i32_64 = arith.constant 0 : i32
      %c0_i32_65 = arith.constant 0 : i32
      %139 = tpu.memref_slice %arg4[%138, %c0_i32_65] : memref<50x128xf32, #tpu.memory_space<any>> -> memref<1x128xf32, #tpu.memory_space<any>>
      %c0_i32_66 = arith.constant 0 : i32
      %c0_i32_67 = arith.constant 0 : i32
      %140 = tpu.memref_slice %arg6[%c0_i32_63, %c0_i32_66, %c0_i32_67] : memref<2x1x128xf32, #tpu.memory_space<vmem>> -> memref<1x1x128xf32, #tpu.memory_space<vmem>>
      %141 = tpu.memref_squeeze %140 : memref<1x1x128xf32, #tpu.memory_space<vmem>> -> memref<1x128xf32, #tpu.memory_space<vmem>>
      %142 = tpu.memref_slice %arg7[%c0_i32_64] : memref<2x!tpu.dma_semaphore, #tpu.memory_space<semaphore_mem>> -> memref<1x!tpu.dma_semaphore, #tpu.memory_space<semaphore_mem>>
      %143 = tpu.memref_squeeze %142 : memref<1x!tpu.dma_semaphore, #tpu.memory_space<semaphore_mem>> -> memref<!tpu.dma_semaphore, #tpu.memory_space<semaphore_mem>>
      tpu.enqueue_dma source(%139 : memref<1x128xf32, #tpu.memory_space<any>>) target(%141 : memref<1x128xf32, #tpu.memory_space<vmem>>) target_semaphore(%143 : memref<!tpu.dma_semaphore, #tpu.memory_space<semaphore_mem>>)
    } else {
    }
    %cst_34 = arith.constant 0.000000e+00 : f32
    %76 = vector.broadcast %cst_34 : f32 to vector<1x128xf32>
    %c0_i32_35 = arith.constant 0 : i32
    %77 = arith.subi %71, %c0_i32_35 : i32
    %78 = arith.addi %c0_i32_35, %77 : i32
    %c1_i32_36 = arith.constant 1 : i32
    %79 = scf.for %arg8 = %c0_i32_35 to %78 step %c1_i32_36 iter_args(%arg9 = %76) -> (vector<1x128xf32>)  : i32 {
      %c1_i32_62 = arith.constant 1 : i32
      %136 = arith.andi %arg8, %c1_i32_62 : i32
      %c0_i32_63 = arith.constant 0 : i32
      %c0_i32_64 = arith.constant 0 : i32
      %137 = tpu.memref_slice %arg4[%c0_i32_63, %c0_i32_64] : memref<50x128xf32, #tpu.memory_space<any>> -> memref<1x128xf32, #tpu.memory_space<any>>
      %c0_i32_65 = arith.constant 0 : i32
      %c0_i32_66 = arith.constant 0 : i32
      %138 = tpu.memref_slice %arg6[%136, %c0_i32_65, %c0_i32_66] : memref<2x1x128xf32, #tpu.memory_space<vmem>> -> memref<1x1x128xf32, #tpu.memory_space<vmem>>
      %139 = tpu.memref_squeeze %138 : memref<1x1x128xf32, #tpu.memory_space<vmem>> -> memref<1x128xf32, #tpu.memory_space<vmem>>
      %140 = tpu.memref_slice %arg7[%136] : memref<2x!tpu.dma_semaphore, #tpu.memory_space<semaphore_mem>> -> memref<1x!tpu.dma_semaphore, #tpu.memory_space<semaphore_mem>>
      %141 = tpu.memref_squeeze %140 : memref<1x!tpu.dma_semaphore, #tpu.memory_space<semaphore_mem>> -> memref<!tpu.dma_semaphore, #tpu.memory_space<semaphore_mem>>
      tpu.wait_dma2 semaphore(%141 : memref<!tpu.dma_semaphore, #tpu.memory_space<semaphore_mem>>) src(%137 : memref<1x128xf32, #tpu.memory_space<any>>) dst(%139 : memref<1x128xf32, #tpu.memory_space<vmem>>)
      %c1_i32_67 = arith.constant 1 : i32
      %142 = arith.addi %arg8, %c1_i32_67 : i32
      %143 = arith.cmpi slt, %142, %71 : i32
      %144 = arith.extui %143 : i1 to i32
      %c0_i32_68 = arith.constant 0 : i32
      %145 = arith.cmpi ne, %144, %c0_i32_68 : i32
      scf.if %145 {
        %c1_i32_71 = arith.constant 1 : i32
        %150 = arith.addi %arg8, %c1_i32_71 : i32
        %c1_i32_72 = arith.constant 1 : i32
        %151 = arith.subi %c1_i32_72, %136 : i32
        %152 = arith.addi %72, %150 : i32
        %153 = arith.index_cast %152 : i32 to index
        %154 = memref.load %arg1[%153] : memref<32xi32, #tpu.memory_space<smem>>
        %c0_i32_73 = arith.constant 0 : i32
        %155 = tpu.memref_slice %arg4[%154, %c0_i32_73] : memref<50x128xf32, #tpu.memory_space<any>> -> memref<1x128xf32, #tpu.memory_space<any>>
        %c0_i32_74 = arith.constant 0 : i32
        %c0_i32_75 = arith.constant 0 : i32
        %156 = tpu.memref_slice %arg6[%151, %c0_i32_74, %c0_i32_75] : memref<2x1x128xf32, #tpu.memory_space<vmem>> -> memref<1x1x128xf32, #tpu.memory_space<vmem>>
        %157 = tpu.memref_squeeze %156 : memref<1x1x128xf32, #tpu.memory_space<vmem>> -> memref<1x128xf32, #tpu.memory_space<vmem>>
        %158 = tpu.memref_slice %arg7[%151] : memref<2x!tpu.dma_semaphore, #tpu.memory_space<semaphore_mem>> -> memref<1x!tpu.dma_semaphore, #tpu.memory_space<semaphore_mem>>
        %159 = tpu.memref_squeeze %158 : memref<1x!tpu.dma_semaphore, #tpu.memory_space<semaphore_mem>> -> memref<!tpu.dma_semaphore, #tpu.memory_space<semaphore_mem>>
        tpu.enqueue_dma source(%155 : memref<1x128xf32, #tpu.memory_space<any>>) target(%157 : memref<1x128xf32, #tpu.memory_space<vmem>>) target_semaphore(%159 : memref<!tpu.dma_semaphore, #tpu.memory_space<semaphore_mem>>)
      } else {
      }
      %146 = arith.index_cast %136 : i32 to index
      %c0_69 = arith.constant 0 : index
      %c0_70 = arith.constant 0 : index
      %147 = vector.load %arg6[%146, %c0_69, %c0_70] : memref<2x1x128xf32, #tpu.memory_space<vmem>>, vector<1x1x128xf32>
      %148 = vector.shape_cast %147 : vector<1x1x128xf32> to vector<1x128xf32>
      %149 = arith.addf %arg9, %148 : vector<1x128xf32>
      scf.yield %149 : vector<1x128xf32>
    }
    %80 = arith.index_cast %69 : i32 to index
    %81 = memref.load %arg3[%80] : memref<8xf32, #tpu.memory_space<smem>>
    %82 = vector.broadcast %81 : f32 to vector<1x128xf32>
    %83 = arith.mulf %79, %82 : vector<1x128xf32>
    %c4 = arith.constant 4 : index
    %c0_37 = arith.constant 0 : index
    %84 = vector.load %arg5[%c4, %c0_37] : memref<8x128xf32, #tpu.memory_space<vmem>>, vector<1x128xf32>
    tpu.vector_store %arg5[%c4, %c0_37], %83 {strides = array<i32>} : memref<8x128xf32, #tpu.memory_space<vmem>>, vector<1x128xf32>,
    %c8_i32_38 = arith.constant 8 : i32
    %85 = arith.muli %arg0, %c8_i32_38 : i32
    %c5_i32 = arith.constant 5 : i32
    %86 = arith.addi %85, %c5_i32 : i32
    %87 = arith.index_cast %86 : i32 to index
    %88 = memref.load %arg2[%87] : memref<8xi32, #tpu.memory_space<smem>>
    %c4_i32_39 = arith.constant 4 : i32
    %89 = arith.muli %86, %c4_i32_39 : i32
    %c0_i32_40 = arith.constant 0 : i32
    %90 = arith.cmpi sgt, %88, %c0_i32_40 : i32
    %91 = arith.extui %90 : i1 to i32
    %c0_i32_41 = arith.constant 0 : i32
    %92 = arith.cmpi ne, %91, %c0_i32_41 : i32
    scf.if %92 {
      %c0_i32_62 = arith.constant 0 : i32
      %136 = arith.addi %89, %c0_i32_62 : i32
      %137 = arith.index_cast %136 : i32 to index
      %138 = memref.load %arg1[%137] : memref<32xi32, #tpu.memory_space<smem>>
      %c0_i32_63 = arith.constant 0 : i32
      %c0_i32_64 = arith.constant 0 : i32
      %c0_i32_65 = arith.constant 0 : i32
      %139 = tpu.memref_slice %arg4[%138, %c0_i32_65] : memref<50x128xf32, #tpu.memory_space<any>> -> memref<1x128xf32, #tpu.memory_space<any>>
      %c0_i32_66 = arith.constant 0 : i32
      %c0_i32_67 = arith.constant 0 : i32
      %140 = tpu.memref_slice %arg6[%c0_i32_63, %c0_i32_66, %c0_i32_67] : memref<2x1x128xf32, #tpu.memory_space<vmem>> -> memref<1x1x128xf32, #tpu.memory_space<vmem>>
      %141 = tpu.memref_squeeze %140 : memref<1x1x128xf32, #tpu.memory_space<vmem>> -> memref<1x128xf32, #tpu.memory_space<vmem>>
      %142 = tpu.memref_slice %arg7[%c0_i32_64] : memref<2x!tpu.dma_semaphore, #tpu.memory_space<semaphore_mem>> -> memref<1x!tpu.dma_semaphore, #tpu.memory_space<semaphore_mem>>
      %143 = tpu.memref_squeeze %142 : memref<1x!tpu.dma_semaphore, #tpu.memory_space<semaphore_mem>> -> memref<!tpu.dma_semaphore, #tpu.memory_space<semaphore_mem>>
      tpu.enqueue_dma source(%139 : memref<1x128xf32, #tpu.memory_space<any>>) target(%141 : memref<1x128xf32, #tpu.memory_space<vmem>>) target_semaphore(%143 : memref<!tpu.dma_semaphore, #tpu.memory_space<semaphore_mem>>)
    } else {
    }
    %cst_42 = arith.constant 0.000000e+00 : f32
    %93 = vector.broadcast %cst_42 : f32 to vector<1x128xf32>
    %c0_i32_43 = arith.constant 0 : i32
    %94 = arith.subi %88, %c0_i32_43 : i32
    %95 = arith.addi %c0_i32_43, %94 : i32
    %c1_i32_44 = arith.constant 1 : i32
    %96 = scf.for %arg8 = %c0_i32_43 to %95 step %c1_i32_44 iter_args(%arg9 = %93) -> (vector<1x128xf32>)  : i32 {
      %c1_i32_62 = arith.constant 1 : i32
      %136 = arith.andi %arg8, %c1_i32_62 : i32
      %c0_i32_63 = arith.constant 0 : i32
      %c0_i32_64 = arith.constant 0 : i32
      %137 = tpu.memref_slice %arg4[%c0_i32_63, %c0_i32_64] : memref<50x128xf32, #tpu.memory_space<any>> -> memref<1x128xf32, #tpu.memory_space<any>>
      %c0_i32_65 = arith.constant 0 : i32
      %c0_i32_66 = arith.constant 0 : i32
      %138 = tpu.memref_slice %arg6[%136, %c0_i32_65, %c0_i32_66] : memref<2x1x128xf32, #tpu.memory_space<vmem>> -> memref<1x1x128xf32, #tpu.memory_space<vmem>>
      %139 = tpu.memref_squeeze %138 : memref<1x1x128xf32, #tpu.memory_space<vmem>> -> memref<1x128xf32, #tpu.memory_space<vmem>>
      %140 = tpu.memref_slice %arg7[%136] : memref<2x!tpu.dma_semaphore, #tpu.memory_space<semaphore_mem>> -> memref<1x!tpu.dma_semaphore, #tpu.memory_space<semaphore_mem>>
      %141 = tpu.memref_squeeze %140 : memref<1x!tpu.dma_semaphore, #tpu.memory_space<semaphore_mem>> -> memref<!tpu.dma_semaphore, #tpu.memory_space<semaphore_mem>>
      tpu.wait_dma2 semaphore(%141 : memref<!tpu.dma_semaphore, #tpu.memory_space<semaphore_mem>>) src(%137 : memref<1x128xf32, #tpu.memory_space<any>>) dst(%139 : memref<1x128xf32, #tpu.memory_space<vmem>>)
      %c1_i32_67 = arith.constant 1 : i32
      %142 = arith.addi %arg8, %c1_i32_67 : i32
      %143 = arith.cmpi slt, %142, %88 : i32
      %144 = arith.extui %143 : i1 to i32
      %c0_i32_68 = arith.constant 0 : i32
      %145 = arith.cmpi ne, %144, %c0_i32_68 : i32
      scf.if %145 {
        %c1_i32_71 = arith.constant 1 : i32
        %150 = arith.addi %arg8, %c1_i32_71 : i32
        %c1_i32_72 = arith.constant 1 : i32
        %151 = arith.subi %c1_i32_72, %136 : i32
        %152 = arith.addi %89, %150 : i32
        %153 = arith.index_cast %152 : i32 to index
        %154 = memref.load %arg1[%153] : memref<32xi32, #tpu.memory_space<smem>>
        %c0_i32_73 = arith.constant 0 : i32
        %155 = tpu.memref_slice %arg4[%154, %c0_i32_73] : memref<50x128xf32, #tpu.memory_space<any>> -> memref<1x128xf32, #tpu.memory_space<any>>
        %c0_i32_74 = arith.constant 0 : i32
        %c0_i32_75 = arith.constant 0 : i32
        %156 = tpu.memref_slice %arg6[%151, %c0_i32_74, %c0_i32_75] : memref<2x1x128xf32, #tpu.memory_space<vmem>> -> memref<1x1x128xf32, #tpu.memory_space<vmem>>
        %157 = tpu.memref_squeeze %156 : memref<1x1x128xf32, #tpu.memory_space<vmem>> -> memref<1x128xf32, #tpu.memory_space<vmem>>
        %158 = tpu.memref_slice %arg7[%151] : memref<2x!tpu.dma_semaphore, #tpu.memory_space<semaphore_mem>> -> memref<1x!tpu.dma_semaphore, #tpu.memory_space<semaphore_mem>>
        %159 = tpu.memref_squeeze %158 : memref<1x!tpu.dma_semaphore, #tpu.memory_space<semaphore_mem>> -> memref<!tpu.dma_semaphore, #tpu.memory_space<semaphore_mem>>
        tpu.enqueue_dma source(%155 : memref<1x128xf32, #tpu.memory_space<any>>) target(%157 : memref<1x128xf32, #tpu.memory_space<vmem>>) target_semaphore(%159 : memref<!tpu.dma_semaphore, #tpu.memory_space<semaphore_mem>>)
      } else {
      }
      %146 = arith.index_cast %136 : i32 to index
      %c0_69 = arith.constant 0 : index
      %c0_70 = arith.constant 0 : index
      %147 = vector.load %arg6[%146, %c0_69, %c0_70] : memref<2x1x128xf32, #tpu.memory_space<vmem>>, vector<1x1x128xf32>
      %148 = vector.shape_cast %147 : vector<1x1x128xf32> to vector<1x128xf32>
      %149 = arith.addf %arg9, %148 : vector<1x128xf32>
      scf.yield %149 : vector<1x128xf32>
    }
    %97 = arith.index_cast %86 : i32 to index
    %98 = memref.load %arg3[%97] : memref<8xf32, #tpu.memory_space<smem>>
    %99 = vector.broadcast %98 : f32 to vector<1x128xf32>
    %100 = arith.mulf %96, %99 : vector<1x128xf32>
    %c5 = arith.constant 5 : index
    %c0_45 = arith.constant 0 : index
    %101 = vector.load %arg5[%c5, %c0_45] : memref<8x128xf32, #tpu.memory_space<vmem>>, vector<1x128xf32>
    tpu.vector_store %arg5[%c5, %c0_45], %100 {strides = array<i32>} : memref<8x128xf32, #tpu.memory_space<vmem>>, vector<1x128xf32>,
    %c8_i32_46 = arith.constant 8 : i32
    %102 = arith.muli %arg0, %c8_i32_46 : i32
    %c6_i32 = arith.constant 6 : i32
    %103 = arith.addi %102, %c6_i32 : i32
    %104 = arith.index_cast %103 : i32 to index
    %105 = memref.load %arg2[%104] : memref<8xi32, #tpu.memory_space<smem>>
    %c4_i32_47 = arith.constant 4 : i32
    %106 = arith.muli %103, %c4_i32_47 : i32
    %c0_i32_48 = arith.constant 0 : i32
    %107 = arith.cmpi sgt, %105, %c0_i32_48 : i32
    %108 = arith.extui %107 : i1 to i32
    %c0_i32_49 = arith.constant 0 : i32
    %109 = arith.cmpi ne, %108, %c0_i32_49 : i32
    scf.if %109 {
      %c0_i32_62 = arith.constant 0 : i32
      %136 = arith.addi %106, %c0_i32_62 : i32
      %137 = arith.index_cast %136 : i32 to index
      %138 = memref.load %arg1[%137] : memref<32xi32, #tpu.memory_space<smem>>
      %c0_i32_63 = arith.constant 0 : i32
      %c0_i32_64 = arith.constant 0 : i32
      %c0_i32_65 = arith.constant 0 : i32
      %139 = tpu.memref_slice %arg4[%138, %c0_i32_65] : memref<50x128xf32, #tpu.memory_space<any>> -> memref<1x128xf32, #tpu.memory_space<any>>
      %c0_i32_66 = arith.constant 0 : i32
      %c0_i32_67 = arith.constant 0 : i32
      %140 = tpu.memref_slice %arg6[%c0_i32_63, %c0_i32_66, %c0_i32_67] : memref<2x1x128xf32, #tpu.memory_space<vmem>> -> memref<1x1x128xf32, #tpu.memory_space<vmem>>
      %141 = tpu.memref_squeeze %140 : memref<1x1x128xf32, #tpu.memory_space<vmem>> -> memref<1x128xf32, #tpu.memory_space<vmem>>
      %142 = tpu.memref_slice %arg7[%c0_i32_64] : memref<2x!tpu.dma_semaphore, #tpu.memory_space<semaphore_mem>> -> memref<1x!tpu.dma_semaphore, #tpu.memory_space<semaphore_mem>>
      %143 = tpu.memref_squeeze %142 : memref<1x!tpu.dma_semaphore, #tpu.memory_space<semaphore_mem>> -> memref<!tpu.dma_semaphore, #tpu.memory_space<semaphore_mem>>
      tpu.enqueue_dma source(%139 : memref<1x128xf32, #tpu.memory_space<any>>) target(%141 : memref<1x128xf32, #tpu.memory_space<vmem>>) target_semaphore(%143 : memref<!tpu.dma_semaphore, #tpu.memory_space<semaphore_mem>>)
    } else {
    }
    %cst_50 = arith.constant 0.000000e+00 : f32
    %110 = vector.broadcast %cst_50 : f32 to vector<1x128xf32>
    %c0_i32_51 = arith.constant 0 : i32
    %111 = arith.subi %105, %c0_i32_51 : i32
    %112 = arith.addi %c0_i32_51, %111 : i32
    %c1_i32_52 = arith.constant 1 : i32
    %113 = scf.for %arg8 = %c0_i32_51 to %112 step %c1_i32_52 iter_args(%arg9 = %110) -> (vector<1x128xf32>)  : i32 {
      %c1_i32_62 = arith.constant 1 : i32
      %136 = arith.andi %arg8, %c1_i32_62 : i32
      %c0_i32_63 = arith.constant 0 : i32
      %c0_i32_64 = arith.constant 0 : i32
      %137 = tpu.memref_slice %arg4[%c0_i32_63, %c0_i32_64] : memref<50x128xf32, #tpu.memory_space<any>> -> memref<1x128xf32, #tpu.memory_space<any>>
      %c0_i32_65 = arith.constant 0 : i32
      %c0_i32_66 = arith.constant 0 : i32
      %138 = tpu.memref_slice %arg6[%136, %c0_i32_65, %c0_i32_66] : memref<2x1x128xf32, #tpu.memory_space<vmem>> -> memref<1x1x128xf32, #tpu.memory_space<vmem>>
      %139 = tpu.memref_squeeze %138 : memref<1x1x128xf32, #tpu.memory_space<vmem>> -> memref<1x128xf32, #tpu.memory_space<vmem>>
      %140 = tpu.memref_slice %arg7[%136] : memref<2x!tpu.dma_semaphore, #tpu.memory_space<semaphore_mem>> -> memref<1x!tpu.dma_semaphore, #tpu.memory_space<semaphore_mem>>
      %141 = tpu.memref_squeeze %140 : memref<1x!tpu.dma_semaphore, #tpu.memory_space<semaphore_mem>> -> memref<!tpu.dma_semaphore, #tpu.memory_space<semaphore_mem>>
      tpu.wait_dma2 semaphore(%141 : memref<!tpu.dma_semaphore, #tpu.memory_space<semaphore_mem>>) src(%137 : memref<1x128xf32, #tpu.memory_space<any>>) dst(%139 : memref<1x128xf32, #tpu.memory_space<vmem>>)
      %c1_i32_67 = arith.constant 1 : i32
      %142 = arith.addi %arg8, %c1_i32_67 : i32
      %143 = arith.cmpi slt, %142, %105 : i32
      %144 = arith.extui %143 : i1 to i32
      %c0_i32_68 = arith.constant 0 : i32
      %145 = arith.cmpi ne, %144, %c0_i32_68 : i32
      scf.if %145 {
        %c1_i32_71 = arith.constant 1 : i32
        %150 = arith.addi %arg8, %c1_i32_71 : i32
        %c1_i32_72 = arith.constant 1 : i32
        %151 = arith.subi %c1_i32_72, %136 : i32
        %152 = arith.addi %106, %150 : i32
        %153 = arith.index_cast %152 : i32 to index
        %154 = memref.load %arg1[%153] : memref<32xi32, #tpu.memory_space<smem>>
        %c0_i32_73 = arith.constant 0 : i32
        %155 = tpu.memref_slice %arg4[%154, %c0_i32_73] : memref<50x128xf32, #tpu.memory_space<any>> -> memref<1x128xf32, #tpu.memory_space<any>>
        %c0_i32_74 = arith.constant 0 : i32
        %c0_i32_75 = arith.constant 0 : i32
        %156 = tpu.memref_slice %arg6[%151, %c0_i32_74, %c0_i32_75] : memref<2x1x128xf32, #tpu.memory_space<vmem>> -> memref<1x1x128xf32, #tpu.memory_space<vmem>>
        %157 = tpu.memref_squeeze %156 : memref<1x1x128xf32, #tpu.memory_space<vmem>> -> memref<1x128xf32, #tpu.memory_space<vmem>>
        %158 = tpu.memref_slice %arg7[%151] : memref<2x!tpu.dma_semaphore, #tpu.memory_space<semaphore_mem>> -> memref<1x!tpu.dma_semaphore, #tpu.memory_space<semaphore_mem>>
        %159 = tpu.memref_squeeze %158 : memref<1x!tpu.dma_semaphore, #tpu.memory_space<semaphore_mem>> -> memref<!tpu.dma_semaphore, #tpu.memory_space<semaphore_mem>>
        tpu.enqueue_dma source(%155 : memref<1x128xf32, #tpu.memory_space<any>>) target(%157 : memref<1x128xf32, #tpu.memory_space<vmem>>) target_semaphore(%159 : memref<!tpu.dma_semaphore, #tpu.memory_space<semaphore_mem>>)
      } else {
      }
      %146 = arith.index_cast %136 : i32 to index
      %c0_69 = arith.constant 0 : index
      %c0_70 = arith.constant 0 : index
      %147 = vector.load %arg6[%146, %c0_69, %c0_70] : memref<2x1x128xf32, #tpu.memory_space<vmem>>, vector<1x1x128xf32>
      %148 = vector.shape_cast %147 : vector<1x1x128xf32> to vector<1x128xf32>
      %149 = arith.addf %arg9, %148 : vector<1x128xf32>
      scf.yield %149 : vector<1x128xf32>
    }
    %114 = arith.index_cast %103 : i32 to index
    %115 = memref.load %arg3[%114] : memref<8xf32, #tpu.memory_space<smem>>
    %116 = vector.broadcast %115 : f32 to vector<1x128xf32>
    %117 = arith.mulf %113, %116 : vector<1x128xf32>
    %c6 = arith.constant 6 : index
    %c0_53 = arith.constant 0 : index
    %118 = vector.load %arg5[%c6, %c0_53] : memref<8x128xf32, #tpu.memory_space<vmem>>, vector<1x128xf32>
    tpu.vector_store %arg5[%c6, %c0_53], %117 {strides = array<i32>} : memref<8x128xf32, #tpu.memory_space<vmem>>, vector<1x128xf32>,
    %c8_i32_54 = arith.constant 8 : i32
    %119 = arith.muli %arg0, %c8_i32_54 : i32
    %c7_i32 = arith.constant 7 : i32
    %120 = arith.addi %119, %c7_i32 : i32
    %121 = arith.index_cast %120 : i32 to index
    %122 = memref.load %arg2[%121] : memref<8xi32, #tpu.memory_space<smem>>
    %c4_i32_55 = arith.constant 4 : i32
    %123 = arith.muli %120, %c4_i32_55 : i32
    %c0_i32_56 = arith.constant 0 : i32
    %124 = arith.cmpi sgt, %122, %c0_i32_56 : i32
    %125 = arith.extui %124 : i1 to i32
    %c0_i32_57 = arith.constant 0 : i32
    %126 = arith.cmpi ne, %125, %c0_i32_57 : i32
    scf.if %126 {
      %c0_i32_62 = arith.constant 0 : i32
      %136 = arith.addi %123, %c0_i32_62 : i32
      %137 = arith.index_cast %136 : i32 to index
      %138 = memref.load %arg1[%137] : memref<32xi32, #tpu.memory_space<smem>>
      %c0_i32_63 = arith.constant 0 : i32
      %c0_i32_64 = arith.constant 0 : i32
      %c0_i32_65 = arith.constant 0 : i32
      %139 = tpu.memref_slice %arg4[%138, %c0_i32_65] : memref<50x128xf32, #tpu.memory_space<any>> -> memref<1x128xf32, #tpu.memory_space<any>>
      %c0_i32_66 = arith.constant 0 : i32
      %c0_i32_67 = arith.constant 0 : i32
      %140 = tpu.memref_slice %arg6[%c0_i32_63, %c0_i32_66, %c0_i32_67] : memref<2x1x128xf32, #tpu.memory_space<vmem>> -> memref<1x1x128xf32, #tpu.memory_space<vmem>>
      %141 = tpu.memref_squeeze %140 : memref<1x1x128xf32, #tpu.memory_space<vmem>> -> memref<1x128xf32, #tpu.memory_space<vmem>>
      %142 = tpu.memref_slice %arg7[%c0_i32_64] : memref<2x!tpu.dma_semaphore, #tpu.memory_space<semaphore_mem>> -> memref<1x!tpu.dma_semaphore, #tpu.memory_space<semaphore_mem>>
      %143 = tpu.memref_squeeze %142 : memref<1x!tpu.dma_semaphore, #tpu.memory_space<semaphore_mem>> -> memref<!tpu.dma_semaphore, #tpu.memory_space<semaphore_mem>>
      tpu.enqueue_dma source(%139 : memref<1x128xf32, #tpu.memory_space<any>>) target(%141 : memref<1x128xf32, #tpu.memory_space<vmem>>) target_semaphore(%143 : memref<!tpu.dma_semaphore, #tpu.memory_space<semaphore_mem>>)
    } else {
    }
    %cst_58 = arith.constant 0.000000e+00 : f32
    %127 = vector.broadcast %cst_58 : f32 to vector<1x128xf32>
    %c0_i32_59 = arith.constant 0 : i32
    %128 = arith.subi %122, %c0_i32_59 : i32
    %129 = arith.addi %c0_i32_59, %128 : i32
    %c1_i32_60 = arith.constant 1 : i32
    %130 = scf.for %arg8 = %c0_i32_59 to %129 step %c1_i32_60 iter_args(%arg9 = %127) -> (vector<1x128xf32>)  : i32 {
      %c1_i32_62 = arith.constant 1 : i32
      %136 = arith.andi %arg8, %c1_i32_62 : i32
      %c0_i32_63 = arith.constant 0 : i32
      %c0_i32_64 = arith.constant 0 : i32
      %137 = tpu.memref_slice %arg4[%c0_i32_63, %c0_i32_64] : memref<50x128xf32, #tpu.memory_space<any>> -> memref<1x128xf32, #tpu.memory_space<any>>
      %c0_i32_65 = arith.constant 0 : i32
      %c0_i32_66 = arith.constant 0 : i32
      %138 = tpu.memref_slice %arg6[%136, %c0_i32_65, %c0_i32_66] : memref<2x1x128xf32, #tpu.memory_space<vmem>> -> memref<1x1x128xf32, #tpu.memory_space<vmem>>
      %139 = tpu.memref_squeeze %138 : memref<1x1x128xf32, #tpu.memory_space<vmem>> -> memref<1x128xf32, #tpu.memory_space<vmem>>
      %140 = tpu.memref_slice %arg7[%136] : memref<2x!tpu.dma_semaphore, #tpu.memory_space<semaphore_mem>> -> memref<1x!tpu.dma_semaphore, #tpu.memory_space<semaphore_mem>>
      %141 = tpu.memref_squeeze %140 : memref<1x!tpu.dma_semaphore, #tpu.memory_space<semaphore_mem>> -> memref<!tpu.dma_semaphore, #tpu.memory_space<semaphore_mem>>
      tpu.wait_dma2 semaphore(%141 : memref<!tpu.dma_semaphore, #tpu.memory_space<semaphore_mem>>) src(%137 : memref<1x128xf32, #tpu.memory_space<any>>) dst(%139 : memref<1x128xf32, #tpu.memory_space<vmem>>)
      %c1_i32_67 = arith.constant 1 : i32
      %142 = arith.addi %arg8, %c1_i32_67 : i32
      %143 = arith.cmpi slt, %142, %122 : i32
      %144 = arith.extui %143 : i1 to i32
      %c0_i32_68 = arith.constant 0 : i32
      %145 = arith.cmpi ne, %144, %c0_i32_68 : i32
      scf.if %145 {
        %c1_i32_71 = arith.constant 1 : i32
        %150 = arith.addi %arg8, %c1_i32_71 : i32
        %c1_i32_72 = arith.constant 1 : i32
        %151 = arith.subi %c1_i32_72, %136 : i32
        %152 = arith.addi %123, %150 : i32
        %153 = arith.index_cast %152 : i32 to index
        %154 = memref.load %arg1[%153] : memref<32xi32, #tpu.memory_space<smem>>
        %c0_i32_73 = arith.constant 0 : i32
        %155 = tpu.memref_slice %arg4[%154, %c0_i32_73] : memref<50x128xf32, #tpu.memory_space<any>> -> memref<1x128xf32, #tpu.memory_space<any>>
        %c0_i32_74 = arith.constant 0 : i32
        %c0_i32_75 = arith.constant 0 : i32
        %156 = tpu.memref_slice %arg6[%151, %c0_i32_74, %c0_i32_75] : memref<2x1x128xf32, #tpu.memory_space<vmem>> -> memref<1x1x128xf32, #tpu.memory_space<vmem>>
        %157 = tpu.memref_squeeze %156 : memref<1x1x128xf32, #tpu.memory_space<vmem>> -> memref<1x128xf32, #tpu.memory_space<vmem>>
        %158 = tpu.memref_slice %arg7[%151] : memref<2x!tpu.dma_semaphore, #tpu.memory_space<semaphore_mem>> -> memref<1x!tpu.dma_semaphore, #tpu.memory_space<semaphore_mem>>
        %159 = tpu.memref_squeeze %158 : memref<1x!tpu.dma_semaphore, #tpu.memory_space<semaphore_mem>> -> memref<!tpu.dma_semaphore, #tpu.memory_space<semaphore_mem>>
        tpu.enqueue_dma source(%155 : memref<1x128xf32, #tpu.memory_space<any>>) target(%157 : memref<1x128xf32, #tpu.memory_space<vmem>>) target_semaphore(%159 : memref<!tpu.dma_semaphore, #tpu.memory_space<semaphore_mem>>)
      } else {
      }
      %146 = arith.index_cast %136 : i32 to index
      %c0_69 = arith.constant 0 : index
      %c0_70 = arith.constant 0 : index
      %147 = vector.load %arg6[%146, %c0_69, %c0_70] : memref<2x1x128xf32, #tpu.memory_space<vmem>>, vector<1x1x128xf32>
      %148 = vector.shape_cast %147 : vector<1x1x128xf32> to vector<1x128xf32>
      %149 = arith.addf %arg9, %148 : vector<1x128xf32>
      scf.yield %149 : vector<1x128xf32>
    }
    %131 = arith.index_cast %120 : i32 to index
    %132 = memref.load %arg3[%131] : memref<8xf32, #tpu.memory_space<smem>>
    %133 = vector.broadcast %132 : f32 to vector<1x128xf32>
    %134 = arith.mulf %130, %133 : vector<1x128xf32>
    %c7 = arith.constant 7 : index
    %c0_61 = arith.constant 0 : index
    %135 = vector.load %arg5[%c7, %c0_61] : memref<8x128xf32, #tpu.memory_space<vmem>>, vector<1x128xf32>
    tpu.vector_store %arg5[%c7, %c0_61], %134 {strides = array<i32>} : memref<8x128xf32, #tpu.memory_space<vmem>>, vector<1x128xf32>,
    return
  }
  func.func @transform_0(%arg0: i32) -> i32 {
    %c0_i32 = arith.constant 0 : i32
    %c0_i32_0 = arith.constant 0 : i32
    return %c0_i32 : i32
  }
  func.func @transform_1(%arg0: i32) -> i32 {
    %c0_i32 = arith.constant 0 : i32
    %c0_i32_0 = arith.constant 0 : i32
    return %c0_i32 : i32
  }
  func.func @transform_2(%arg0: i32) -> i32 {
    %c0_i32 = arith.constant 0 : i32
    %c0_i32_0 = arith.constant 0 : i32
    return %c0_i32 : i32
  }
  func.func @transform_4(%arg0: i32) -> (i32, i32) {
    %c0_i32 = arith.constant 0 : i32
    %c0_i32_0 = arith.constant 0 : i32
    return %arg0, %c0_i32 : i32, i32
  }
}

</mosaic_0001>

<llo_original>
// kernel: tpu_custom_call.1
$region0: #{tpu_custom_call.1}
  #allocation0 [shape = 'u32[]', space=smem, size = 0x4, offset = 0x4, fixed_abs, tag = 'smem constant byte address 0x4 - core index']
  #allocation1 [shape = 'u32[144,128]{1,0:T(1,128)}', space=vmem, size = 0x12000, scoped, tag = 'internal scratch']
  #allocation2 [shape = 'f32[2,1,128]{2,1,0:T(1,128)}', space=vmem, size = 0x400, scoped, tag = 'scratch operand']
  #allocation3 [shape = 's32[2]{0}', space=sflag, size = 0x8, scoped, tag = 'scratch operand']
  #allocation12 [shape = 's32[]', space=sflag, size = 0x4, offset = 0, fixed_abs, tag = 'sflag constant byte address 0x0 - dummy sync flag']
  #allocation13 [shape = 's32[]', space=sflag, size = 0x4, offset = 0, fixed_abs, tag = 'sflag constant byte address 0x0 - dummy sync flag']
  #allocation14 [shape = 'u32[]', space=smem, size = 0x4, offset = 0x44, fixed_abs, tag = 'smem constant byte address 0x44 - assertion arg 0']
  #allocation15 [shape = 'u32[]', space=smem, size = 0x4, offset = 0x48, fixed_abs, tag = 'smem constant byte address 0x48 - assertion arg 1']
  #allocation16 [shape = 's32[]', space=sflag, size = 0x4, offset = 0, fixed_abs, tag = 'sflag constant byte address 0x0 - dummy sync flag']
  #allocation17 [shape = 's32[]', space=sflag, size = 0x4, offset = 0, fixed_abs, tag = 'sflag constant byte address 0x0 - dummy sync flag']
  #allocation18 [shape = 's32[]', space=sflag, size = 0x4, offset = 0, fixed_abs, tag = 'sflag constant byte address 0x0 - dummy sync flag']
  #allocation19 [shape = 's32[]', space=sflag, size = 0x4, offset = 0, fixed_abs, tag = 'sflag constant byte address 0x0 - dummy sync flag']
  #allocation20 [shape = 's32[]', space=sflag, size = 0x4, offset = 0, fixed_abs, tag = 'sflag constant byte address 0x0 - dummy sync flag']
  #allocation21 [shape = 's32[]', space=sflag, size = 0x4, offset = 0, fixed_abs, tag = 'sflag constant byte address 0x0 - dummy sync flag']
  #allocation22 [shape = 's32[]', space=sflag, size = 0x4, offset = 0, fixed_abs, tag = 'sflag constant byte address 0x0 - dummy sync flag']
  #allocation23 [shape = 's32[]', space=sflag, size = 0x4, offset = 0, fixed_abs, tag = 'sflag constant byte address 0x0 - dummy sync flag']
  #allocation24 [shape = 's32[]', space=sflag, size = 0x4, offset = 0, fixed_abs, tag = 'sflag constant byte address 0x0 - dummy sync flag']
  #allocation25 [shape = 's32[]', space=sflag, size = 0x4, offset = 0, fixed_abs, tag = 'sflag constant byte address 0x0 - dummy sync flag']
  #allocation26 [shape = 's32[]', space=sflag, size = 0x4, offset = 0, fixed_abs, tag = 'sflag constant byte address 0x0 - dummy sync flag']
  #allocation27 [shape = 's32[]', space=sflag, size = 0x4, offset = 0, fixed_abs, tag = 'sflag constant byte address 0x0 - dummy sync flag']
  #allocation28 [shape = 's32[]', space=sflag, size = 0x4, offset = 0, fixed_abs, tag = 'sflag constant byte address 0x0 - dummy sync flag']
  #allocation29 [shape = 's32[]', space=sflag, size = 0x4, offset = 0, fixed_abs, tag = 'sflag constant byte address 0x0 - dummy sync flag']
  #allocation30 [shape = 's32[]', space=sflag, size = 0x4, offset = 0, fixed_abs, tag = 'sflag constant byte address 0x0 - dummy sync flag']
  #allocation31 [shape = 's32[]', space=sflag, size = 0x4, offset = 0, fixed_abs, tag = 'sflag constant byte address 0x0 - dummy sync flag']
  #allocation32 [shape = 's32[]', space=sflag, size = 0x4, offset = 0, fixed_abs, tag = 'sflag constant byte address 0x0 - dummy sync flag']
  #allocation33 [shape = 's32[]', space=sflag, size = 0x4, offset = 0, fixed_abs, tag = 'sflag constant byte address 0x0 - dummy sync flag']
  #allocation34 [shape = 's32[]', space=sflag, size = 0x4, offset = 0, fixed_abs, tag = 'sflag constant byte address 0x0 - dummy sync flag']
  #allocation35 [shape = 's32[]', space=sflag, size = 0x4, offset = 0, fixed_abs, tag = 'sflag constant byte address 0x0 - dummy sync flag']
  #allocation36 [shape = 's32[]', space=sflag, size = 0x4, offset = 0, fixed_abs, tag = 'sflag constant byte address 0x0 - dummy sync flag']
  #allocation37 [shape = 's32[]', space=sflag, size = 0x4, offset = 0, fixed_abs, tag = 'sflag constant byte address 0x0 - dummy sync flag']
  #allocation38 [shape = 's32[]', space=sflag, size = 0x4, offset = 0, fixed_abs, tag = 'sflag constant byte address 0x0 - dummy sync flag']
  #allocation39 [shape = 's32[]', space=sflag, size = 0x4, offset = 0, fixed_abs, tag = 'sflag constant byte address 0x0 - dummy sync flag']
  #allocation40 [shape = 's32[]', space=sflag, size = 0x4, offset = 0, fixed_abs, tag = 'sflag constant byte address 0x0 - dummy sync flag']
  #allocation41 [shape = 's32[]', space=sflag, size = 0x4, offset = 0, fixed_abs, tag = 'sflag constant byte address 0x0 - dummy sync flag']
  #allocation42 [shape = 's32[]', space=sflag, size = 0x4, offset = 0, fixed_abs, tag = 'sflag constant byte address 0x0 - dummy sync flag']
  #allocation43 [shape = 's32[]', space=sflag, size = 0x4, offset = 0, fixed_abs, tag = 'sflag constant byte address 0x0 - dummy sync flag']
  #allocation44 [shape = 's32[]', space=sflag, size = 0x4, offset = 0, fixed_abs, tag = 'sflag constant byte address 0x0 - dummy sync flag']
  #allocation45 [shape = 's32[]', space=sflag, size = 0x4, offset = 0, fixed_abs, tag = 'sflag constant byte address 0x0 - dummy sync flag']
  %s0 = inlined_call_operand.hbm [shape: s32[32], index: 0, kind: input, shape index: {}]
  %s1 = inlined_call_operand.vmem [shape: s32[8], index: 1, kind: input, shape index: {}]
  %s2 = inlined_call_operand.vmem [shape: f32[8], index: 2, kind: input, shape index: {}]
  %s3 = inlined_call_operand.hbm [shape: f32[50,128], index: 3, kind: input, shape index: {}]
  %s4 = inlined_call_operand.hbm [shape: f32[8,128], index: 4, kind: output, shape index: {}]
  %s5 = sld [smem:[#allocation0]]
  $region218: #{tpu_custom_call.1} parent=0
    _
  %s7 = ssub.s32 1, %s5
  %s8 = scalar_select 0, %s7, %s5
  $region1: #{tpu_custom_call.1} parent=0
    #allocation4 [shape = 'u8[512]{0}', space=smem, size = 0x200, scoped, tag = 'input window, operand 0, single buffered']
    #allocation5 [shape = 's32[1]{0}', space=sflag, size = 0x4, scoped, tag = 'scoped memory for tpu_custom_call.1']
    #allocation6 [shape = 's32[1]{0}', space=sflag, size = 0x4, scoped, tag = 'scoped memory for tpu_custom_call.1']
    #allocation7 [shape = 's32[1]{0}', space=sflag, size = 0x4, scoped, tag = 'scoped memory for tpu_custom_call.1']
    #allocation8 [shape = 'u8[512]{0}', space=smem, size = 0x200, scoped, tag = 'input window, operand 1, single buffered']
    #allocation9 [shape = 'u8[512]{0}', space=smem, size = 0x200, scoped, tag = 'input window, operand 2, single buffered']
    #allocation10 [shape = 's32[1]{0}', space=sflag, size = 0x4, scoped, tag = 'scoped memory for tpu_custom_call.1']
    #allocation11 [shape = 'u8[4096]{0}', space=vmem, size = 0x1000, scoped, tag = 'output window, operand 0, single buffered']
    %9 = vsyncpa [#allocation6], 0
    %10 = vsyncpa [#allocation7], 0
    %11 = vsyncpa [#allocation10], 0
    %12 = vsyncpa [#allocation5], 0
    // Predicated region
    $region2: #{tpu_custom_call.1} parent=1 // pred_check
      _
    $region3: #{tpu_custom_call.1} parent=1 // pred_check_branch
      %14 = sbr.rel (0) target = $region5
    $region4: #{tpu_custom_call.1} parent=1 // pred_region
      %s16 = ssub.s32 16, 16
      %17 = vsyncadd [#allocation6], %s16
      %20 = dma.hbm_to_smem %s0, 16, [#allocation4], [#allocation6]
    $region5: #{tpu_custom_call.1} parent=1 // pred_fallthru
      _
    // Predicated region
    $region6: #{tpu_custom_call.1} parent=1 // pred_check
      _
    $region7: #{tpu_custom_call.1} parent=1 // pred_check_branch
      %22 = sbr.rel (0) target = $region9
    $region8: #{tpu_custom_call.1} parent=1 // pred_region
      %s24 = ssub.s32 16, 16
      %25 = vsyncadd [#allocation7], %s24
      %s27 = sshll.u32 %s1, 4
      %s28 = int_to_ptr.vmem [resolvable:$true] %s27
      %30 = dma.vmem_to_smem %s28, 16, [#allocation8], [#allocation7]
    $region9: #{tpu_custom_call.1} parent=1 // pred_fallthru
      _
    // Predicated region
    $region10: #{tpu_custom_call.1} parent=1 // pred_check
      _
    $region11: #{tpu_custom_call.1} parent=1 // pred_check_branch
      %32 = sbr.rel (0) target = $region13
    $region12: #{tpu_custom_call.1} parent=1 // pred_region
      %s34 = ssub.s32 16, 16
      %35 = vsyncadd [#allocation10], %s34
      %s37 = sshll.u32 %s2, 4
      %s38 = int_to_ptr.vmem [resolvable:$true] %s37
      %40 = dma.vmem_to_smem %s38, 16, [#allocation9], [#allocation10]
    $region13: #{tpu_custom_call.1} parent=1 // pred_fallthru
      _
    // Predicated region
    $region14: #{tpu_custom_call.1} parent=1 // pred_check
      _
    $region15: #{tpu_custom_call.1} parent=1 // pred_check_branch
      %42 = sbr.rel (0) target = $region17
    $region16: #{tpu_custom_call.1} parent=1 // pred_region
      %43 = dma.done [#allocation6], 16
    $region17: #{tpu_custom_call.1} parent=1 // pred_fallthru
      _
    // Predicated region
    $region18: #{tpu_custom_call.1} parent=1 // pred_check
      _
    $region19: #{tpu_custom_call.1} parent=1 // pred_check_branch
      %45 = sbr.rel (0) target = $region21
    $region20: #{tpu_custom_call.1} parent=1 // pred_region
      %46 = dma.done [#allocation7], 16
    $region21: #{tpu_custom_call.1} parent=1 // pred_fallthru
      _
    // Predicated region
    $region22: #{tpu_custom_call.1} parent=1 // pred_check
      _
    $region23: #{tpu_custom_call.1} parent=1 // pred_check_branch
      %48 = sbr.rel (0) target = $region25
    $region24: #{tpu_custom_call.1} parent=1 // pred_region
      %49 = dma.done [#allocation10], 16
    $region25: #{tpu_custom_call.1} parent=1 // pred_fallthru
      _
    %50 = sfence
    %s51 = smul.u32 0, 8
    %s52 = sld [smem:[#allocation8 + %s51]]
    %s53 = smul.u32 0, 32
    %p54 = scmp.gt.s32.totalorder %s52, 0
    // Predicated region
    $region26: #{tpu_custom_call.1} parent=1 // pred_check
      %p55 = pneg %p54
    $region27: #{tpu_custom_call.1} parent=1 // pred_check_branch
      %57 = sbr.rel (%p55) target = $region29
    $region28: #{tpu_custom_call.1} parent=1 // pred_region
      %s58 = sld [smem:[#allocation4 + %s53]]
      %s59 = smul.addr %s58, 16
      %s60 = scalar_lea.hbm %s3, %s59
      // Predicated region
      $region30: #{tpu_custom_call.1} parent=28 // pred_check
        _
      $region31: #{tpu_custom_call.1} parent=28 // pred_check_branch
        %62 = sbr.rel target = $region33
      $region32: #{tpu_custom_call.1} parent=28 // pred_region
        %63 = sst [smem:[#allocation14]] [#allocation13]
        %64 = sst [smem:[#allocation15]] [#allocation12]
      $region33: #{tpu_custom_call.1} parent=28 // pred_fallthru
        _
      %66 = shalt.err (0)
      %s68 = sshll.u32 [#allocation2], 4
      %s69 = int_to_ptr.vmem [resolvable:$true] %s68
      %71 = dma.hbm_to_vmem [thread:$0]  %s60, 16, %s69, [#allocation3]
    $region29: #{tpu_custom_call.1} parent=1 // pred_fallthru
      _
    // While loop
    $region34: #{tpu_custom_call.1} parent=1 // loop_pre_header
      _
    $region35: #{tpu_custom_call.1} parent=1 // loop_header
      %s73 = sphi 0, %s75
      %p74 = scmp.ge.s32.totalorder %s73, %s52
      %v78 = vphi 0.0, %v109
    $region36: #{tpu_custom_call.1} parent=1 // loop_header_branch
      %77 = sbr.rel (%p74) target = $region40
    $region37: #{tpu_custom_call.1} parent=1 // loop_body
      %s79 = sand.u32 %s73, 1
      %s80 = scalar_lea.vmem [#allocation2], %s79
      %s81 = scalar_lea.sflag [#allocation3], %s79
      %s82 = smul.u32 1, 1
      %s83 = sshll.u32 %s82, 4
      %84 = dma.done %s81, %s83
      %s85 = sadd.s32 %s73, 1
      %p86 = scmp.lt.s32.totalorder %s85, %s52
      // Predicated region
      $region41: #{tpu_custom_call.1} parent=37 // pred_check
        %p87 = pneg %p86
      $region42: #{tpu_custom_call.1} parent=37 // pred_check_branch
        %89 = sbr.rel (%p87) target = $region44
      $region43: #{tpu_custom_call.1} parent=37 // pred_region
        %s90 = ssub.s32 1, %s79
        %s91 = sadd.s32 %s53, %s85
        %s92 = sld [smem:[#allocation4 + %s91]]
        %s93 = smul.addr %s92, 16
        %s94 = scalar_lea.hbm %s3, %s93
        %s95 = scalar_lea.vmem [#allocation2], %s90
        %s96 = scalar_lea.sflag [#allocation3], %s90
        // Predicated region
        $region45: #{tpu_custom_call.1} parent=43 // pred_check
          _
        $region46: #{tpu_custom_call.1} parent=43 // pred_check_branch
          %98 = sbr.rel target = $region48
        $region47: #{tpu_custom_call.1} parent=43 // pred_region
          %99 = sst [smem:[#allocation14]] [#allocation17]
          %100 = sst [smem:[#allocation15]] [#allocation16]
        $region48: #{tpu_custom_call.1} parent=43 // pred_fallthru
          _
        %102 = shalt.err (0)
        %s104 = sshll.u32 %s95, 4
        %s105 = int_to_ptr.vmem [resolvable:$true] %s104
        %107 = dma.hbm_to_vmem [thread:$0]  %s94, 16, %s105, %s96
      $region44: #{tpu_custom_call.1} parent=37 // pred_fallthru
        _
      %v108 = vld [vmem:[%s80] sm:$0x1]
      %v109 = vadd.f32 %v78, %v108
    $region38: #{tpu_custom_call.1} parent=1 // loop_footer
      %s75 = sadd.s32 %s73, 1
    $region39: #{tpu_custom_call.1} parent=1 // loop_footer_branch
      %72 = sbr.rel target = $region35
    $region40: #{tpu_custom_call.1} parent=1 // loop_exit
      _
    %s110 = sld [smem:[#allocation9 + %s51]]
    %v111 = vstv %s110
    %v112 = vmul.f32 %v78, %v111
    %113 = vst [vmem:[#allocation11] sm:$0x1] %v112
    %s114 = sadd.s32 %s51, 1
    %s115 = sld [smem:[#allocation8 + %s114]]
    %s116 = smul.u32 %s114, 4
    %p117 = scmp.gt.s32.totalorder %s115, 0
    // Predicated region
    $region49: #{tpu_custom_call.1} parent=1 // pred_check
      %p118 = pneg %p117
    $region50: #{tpu_custom_call.1} parent=1 // pred_check_branch
      %120 = sbr.rel (%p118) target = $region52
    $region51: #{tpu_custom_call.1} parent=1 // pred_region
      %s121 = sld [smem:[#allocation4 + %s116]]
      %s122 = smul.addr %s121, 16
      %s123 = scalar_lea.hbm %s3, %s122
      // Predicated region
      $region53: #{tpu_custom_call.1} parent=51 // pred_check
        _
      $region54: #{tpu_custom_call.1} parent=51 // pred_check_branch
        %125 = sbr.rel target = $region56
      $region55: #{tpu_custom_call.1} parent=51 // pred_region
        %126 = sst [smem:[#allocation14]] [#allocation19]
        %127 = sst [smem:[#allocation15]] [#allocation18]
      $region56: #{tpu_custom_call.1} parent=51 // pred_fallthru
        _
      %129 = shalt.err (0)
      %s131 = sshll.u32 [#allocation2], 4
      %s132 = int_to_ptr.vmem [resolvable:$true] %s131
      %134 = dma.hbm_to_vmem [thread:$0]  %s123, 16, %s132, [#allocation3]
    $region52: #{tpu_custom_call.1} parent=1 // pred_fallthru
      _
    // While loop
    $region57: #{tpu_custom_call.1} parent=1 // loop_pre_header
      _
    $region58: #{tpu_custom_call.1} parent=1 // loop_header
      %s136 = sphi 0, %s138
      %p137 = scmp.ge.s32.totalorder %s136, %s115
      %v141 = vphi 0.0, %v172
    $region59: #{tpu_custom_call.1} parent=1 // loop_header_branch
      %140 = sbr.rel (%p137) target = $region63
    $region60: #{tpu_custom_call.1} parent=1 // loop_body
      %s142 = sand.u32 %s136, 1
      %s143 = scalar_lea.vmem [#allocation2], %s142
      %s144 = scalar_lea.sflag [#allocation3], %s142
      %s145 = smul.u32 1, 1
      %s146 = sshll.u32 %s145, 4
      %147 = dma.done %s144, %s146
      %s148 = sadd.s32 %s136, 1
      %p149 = scmp.lt.s32.totalorder %s148, %s115
      // Predicated region
      $region64: #{tpu_custom_call.1} parent=60 // pred_check
        %p150 = pneg %p149
      $region65: #{tpu_custom_call.1} parent=60 // pred_check_branch
        %152 = sbr.rel (%p150) target = $region67
      $region66: #{tpu_custom_call.1} parent=60 // pred_region
        %s153 = ssub.s32 1, %s142
        %s154 = sadd.s32 %s116, %s148
        %s155 = sld [smem:[#allocation4 + %s154]]
        %s156 = smul.addr %s155, 16
        %s157 = scalar_lea.hbm %s3, %s156
        %s158 = scalar_lea.vmem [#allocation2], %s153
        %s159 = scalar_lea.sflag [#allocation3], %s153
        // Predicated region
        $region68: #{tpu_custom_call.1} parent=66 // pred_check
          _
        $region69: #{tpu_custom_call.1} parent=66 // pred_check_branch
          %161 = sbr.rel target = $region71
        $region70: #{tpu_custom_call.1} parent=66 // pred_region
          %162 = sst [smem:[#allocation14]] [#allocation21]
          %163 = sst [smem:[#allocation15]] [#allocation20]
        $region71: #{tpu_custom_call.1} parent=66 // pred_fallthru
          _
        %165 = shalt.err (0)
        %s167 = sshll.u32 %s158, 4
        %s168 = int_to_ptr.vmem [resolvable:$true] %s167
        %170 = dma.hbm_to_vmem [thread:$0]  %s157, 16, %s168, %s159
      $region67: #{tpu_custom_call.1} parent=60 // pred_fallthru
        _
      %v171 = vld [vmem:[%s143] sm:$0x1]
      %v172 = vadd.f32 %v141, %v171
    $region61: #{tpu_custom_call.1} parent=1 // loop_footer
      %s138 = sadd.s32 %s136, 1
    $region62: #{tpu_custom_call.1} parent=1 // loop_footer_branch
      %135 = sbr.rel target = $region58
    $region63: #{tpu_custom_call.1} parent=1 // loop_exit
      _
    %s173 = sld [smem:[#allocation9 + %s114]]
    %v174 = vstv %s173
    %v175 = vmul.f32 %v141, %v174
    %176 = vst [vmem:[#allocation11 + $0x1] sm:$0x1] %v175
    %s177 = sadd.s32 %s51, 2
    %s178 = sld [smem:[#allocation8 + %s177]]
    %s179 = smul.u32 %s177, 4
    %p180 = scmp.gt.s32.totalorder %s178, 0
    // Predicated region
    $region72: #{tpu_custom_call.1} parent=1 // pred_check
      %p181 = pneg %p180
    $region73: #{tpu_custom_call.1} parent=1 // pred_check_branch
      %183 = sbr.rel (%p181) target = $region75
    $region74: #{tpu_custom_call.1} parent=1 // pred_region
      %s184 = sld [smem:[#allocation4 + %s179]]
      %s185 = smul.addr %s184, 16
      %s186 = scalar_lea.hbm %s3, %s185
      // Predicated region
      $region76: #{tpu_custom_call.1} parent=74 // pred_check
        _
      $region77: #{tpu_custom_call.1} parent=74 // pred_check_branch
        %188 = sbr.rel target = $region79
      $region78: #{tpu_custom_call.1} parent=74 // pred_region
        %189 = sst [smem:[#allocation14]] [#allocation23]
        %190 = sst [smem:[#allocation15]] [#allocation22]
      $region79: #{tpu_custom_call.1} parent=74 // pred_fallthru
        _
      %192 = shalt.err (0)
      %s194 = sshll.u32 [#allocation2], 4
      %s195 = int_to_ptr.vmem [resolvable:$true] %s194
      %197 = dma.hbm_to_vmem [thread:$0]  %s186, 16, %s195, [#allocation3]
    $region75: #{tpu_custom_call.1} parent=1 // pred_fallthru
      _
    // While loop
    $region80: #{tpu_custom_call.1} parent=1 // loop_pre_header
      _
    $region81: #{tpu_custom_call.1} parent=1 // loop_header
      %s199 = sphi 0, %s201
      %p200 = scmp.ge.s32.totalorder %s199, %s178
      %v204 = vphi 0.0, %v235
    $region82: #{tpu_custom_call.1} parent=1 // loop_header_branch
      %203 = sbr.rel (%p200) target = $region86
    $region83: #{tpu_custom_call.1} parent=1 // loop_body
      %s205 = sand.u32 %s199, 1
      %s206 = scalar_lea.vmem [#allocation2], %s205
      %s207 = scalar_lea.sflag [#allocation3], %s205
      %s208 = smul.u32 1, 1
      %s209 = sshll.u32 %s208, 4
      %210 = dma.done %s207, %s209
      %s211 = sadd.s32 %s199, 1
      %p212 = scmp.lt.s32.totalorder %s211, %s178
      // Predicated region
      $region87: #{tpu_custom_call.1} parent=83 // pred_check
        %p213 = pneg %p212
      $region88: #{tpu_custom_call.1} parent=83 // pred_check_branch
        %215 = sbr.rel (%p213) target = $region90
      $region89: #{tpu_custom_call.1} parent=83 // pred_region
        %s216 = ssub.s32 1, %s205
        %s217 = sadd.s32 %s179, %s211
        %s218 = sld [smem:[#allocation4 + %s217]]
        %s219 = smul.addr %s218, 16
        %s220 = scalar_lea.hbm %s3, %s219
        %s221 = scalar_lea.vmem [#allocation2], %s216
        %s222 = scalar_lea.sflag [#allocation3], %s216
        // Predicated region
        $region91: #{tpu_custom_call.1} parent=89 // pred_check
          _
        $region92: #{tpu_custom_call.1} parent=89 // pred_check_branch
          %224 = sbr.rel target = $region94
        $region93: #{tpu_custom_call.1} parent=89 // pred_region
          %225 = sst [smem:[#allocation14]] [#allocation25]
          %226 = sst [smem:[#allocation15]] [#allocation24]
        $region94: #{tpu_custom_call.1} parent=89 // pred_fallthru
          _
        %228 = shalt.err (0)
        %s230 = sshll.u32 %s221, 4
        %s231 = int_to_ptr.vmem [resolvable:$true] %s230
        %233 = dma.hbm_to_vmem [thread:$0]  %s220, 16, %s231, %s222
      $region90: #{tpu_custom_call.1} parent=83 // pred_fallthru
        _
      %v234 = vld [vmem:[%s206] sm:$0x1]
      %v235 = vadd.f32 %v204, %v234
    $region84: #{tpu_custom_call.1} parent=1 // loop_footer
      %s201 = sadd.s32 %s199, 1
    $region85: #{tpu_custom_call.1} parent=1 // loop_footer_branch
      %198 = sbr.rel target = $region81
    $region86: #{tpu_custom_call.1} parent=1 // loop_exit
      _
    %s236 = sld [smem:[#allocation9 + %s177]]
    %v237 = vstv %s236
    %v238 = vmul.f32 %v204, %v237
    %239 = vst [vmem:[#allocation11 + $0x2] sm:$0x1] %v238
    %s240 = sadd.s32 %s51, 3
    %s241 = sld [smem:[#allocation8 + %s240]]
    %s242 = smul.u32 %s240, 4
    %p243 = scmp.gt.s32.totalorder %s241, 0
    // Predicated region
    $region95: #{tpu_custom_call.1} parent=1 // pred_check
      %p244 = pneg %p243
    $region96: #{tpu_custom_call.1} parent=1 // pred_check_branch
      %246 = sbr.rel (%p244) target = $region98
    $region97: #{tpu_custom_call.1} parent=1 // pred_region
      %s247 = sld [smem:[#allocation4 + %s242]]
      %s248 = smul.addr %s247, 16
      %s249 = scalar_lea.hbm %s3, %s248
      // Predicated region
      $region99: #{tpu_custom_call.1} parent=97 // pred_check
        _
      $region100: #{tpu_custom_call.1} parent=97 // pred_check_branch
        %251 = sbr.rel target = $region102
      $region101: #{tpu_custom_call.1} parent=97 // pred_region
        %252 = sst [smem:[#allocation14]] [#allocation27]
        %253 = sst [smem:[#allocation15]] [#allocation26]
      $region102: #{tpu_custom_call.1} parent=97 // pred_fallthru
        _
      %255 = shalt.err (0)
      %s257 = sshll.u32 [#allocation2], 4
      %s258 = int_to_ptr.vmem [resolvable:$true] %s257
      %260 = dma.hbm_to_vmem [thread:$0]  %s249, 16, %s258, [#allocation3]
    $region98: #{tpu_custom_call.1} parent=1 // pred_fallthru
      _
    // While loop
    $region103: #{tpu_custom_call.1} parent=1 // loop_pre_header
      _
    $region104: #{tpu_custom_call.1} parent=1 // loop_header
      %s262 = sphi 0, %s264
      %p263 = scmp.ge.s32.totalorder %s262, %s241
      %v267 = vphi 0.0, %v298
    $region105: #{tpu_custom_call.1} parent=1 // loop_header_branch
      %266 = sbr.rel (%p263) target = $region109
    $region106: #{tpu_custom_call.1} parent=1 // loop_body
      %s268 = sand.u32 %s262, 1
      %s269 = scalar_lea.vmem [#allocation2], %s268
      %s270 = scalar_lea.sflag [#allocation3], %s268
      %s271 = smul.u32 1, 1
      %s272 = sshll.u32 %s271, 4
      %273 = dma.done %s270, %s272
      %s274 = sadd.s32 %s262, 1
      %p275 = scmp.lt.s32.totalorder %s274, %s241
      // Predicated region
      $region110: #{tpu_custom_call.1} parent=106 // pred_check
        %p276 = pneg %p275
      $region111: #{tpu_custom_call.1} parent=106 // pred_check_branch
        %278 = sbr.rel (%p276) target = $region113
      $region112: #{tpu_custom_call.1} parent=106 // pred_region
        %s279 = ssub.s32 1, %s268
        %s280 = sadd.s32 %s242, %s274
        %s281 = sld [smem:[#allocation4 + %s280]]
        %s282 = smul.addr %s281, 16
        %s283 = scalar_lea.hbm %s3, %s282
        %s284 = scalar_lea.vmem [#allocation2], %s279
        %s285 = scalar_lea.sflag [#allocation3], %s279
        // Predicated region
        $region114: #{tpu_custom_call.1} parent=112 // pred_check
          _
        $region115: #{tpu_custom_call.1} parent=112 // pred_check_branch
          %287 = sbr.rel target = $region117
        $region116: #{tpu_custom_call.1} parent=112 // pred_region
          %288 = sst [smem:[#allocation14]] [#allocation29]
          %289 = sst [smem:[#allocation15]] [#allocation28]
        $region117: #{tpu_custom_call.1} parent=112 // pred_fallthru
          _
        %291 = shalt.err (0)
        %s293 = sshll.u32 %s284, 4
        %s294 = int_to_ptr.vmem [resolvable:$true] %s293
        %296 = dma.hbm_to_vmem [thread:$0]  %s283, 16, %s294, %s285
      $region113: #{tpu_custom_call.1} parent=106 // pred_fallthru
        _
      %v297 = vld [vmem:[%s269] sm:$0x1]
      %v298 = vadd.f32 %v267, %v297
    $region107: #{tpu_custom_call.1} parent=1 // loop_footer
      %s264 = sadd.s32 %s262, 1
    $region108: #{tpu_custom_call.1} parent=1 // loop_footer_branch
      %261 = sbr.rel target = $region104
    $region109: #{tpu_custom_call.1} parent=1 // loop_exit
      _
    %s299 = sld [smem:[#allocation9 + %s240]]
    %v300 = vstv %s299
    %v301 = vmul.f32 %v267, %v300
    %302 = vst [vmem:[#allocation11 + $0x3] sm:$0x1] %v301
    %s303 = sadd.s32 %s51, 4
    %s304 = sld [smem:[#allocation8 + %s303]]
    %s305 = smul.u32 %s303, 4
    %p306 = scmp.gt.s32.totalorder %s304, 0
    // Predicated region
    $region118: #{tpu_custom_call.1} parent=1 // pred_check
      %p307 = pneg %p306
    $region119: #{tpu_custom_call.1} parent=1 // pred_check_branch
      %309 = sbr.rel (%p307) target = $region121
    $region120: #{tpu_custom_call.1} parent=1 // pred_region
      %s310 = sld [smem:[#allocation4 + %s305]]
      %s311 = smul.addr %s310, 16
      %s312 = scalar_lea.hbm %s3, %s311
      // Predicated region
      $region122: #{tpu_custom_call.1} parent=120 // pred_check
        _
      $region123: #{tpu_custom_call.1} parent=120 // pred_check_branch
        %314 = sbr.rel target = $region125
      $region124: #{tpu_custom_call.1} parent=120 // pred_region
        %315 = sst [smem:[#allocation14]] [#allocation31]
        %316 = sst [smem:[#allocation15]] [#allocation30]
      $region125: #{tpu_custom_call.1} parent=120 // pred_fallthru
        _
      %318 = shalt.err (0)
      %s320 = sshll.u32 [#allocation2], 4
      %s321 = int_to_ptr.vmem [resolvable:$true] %s320
      %323 = dma.hbm_to_vmem [thread:$0]  %s312, 16, %s321, [#allocation3]
    $region121: #{tpu_custom_call.1} parent=1 // pred_fallthru
      _
    // While loop
    $region126: #{tpu_custom_call.1} parent=1 // loop_pre_header
      _
    $region127: #{tpu_custom_call.1} parent=1 // loop_header
      %s325 = sphi 0, %s327
      %p326 = scmp.ge.s32.totalorder %s325, %s304
      %v330 = vphi 0.0, %v361
    $region128: #{tpu_custom_call.1} parent=1 // loop_header_branch
      %329 = sbr.rel (%p326) target = $region132
    $region129: #{tpu_custom_call.1} parent=1 // loop_body
      %s331 = sand.u32 %s325, 1
      %s332 = scalar_lea.vmem [#allocation2], %s331
      %s333 = scalar_lea.sflag [#allocation3], %s331
      %s334 = smul.u32 1, 1
      %s335 = sshll.u32 %s334, 4
      %336 = dma.done %s333, %s335
      %s337 = sadd.s32 %s325, 1
      %p338 = scmp.lt.s32.totalorder %s337, %s304
      // Predicated region
      $region133: #{tpu_custom_call.1} parent=129 // pred_check
        %p339 = pneg %p338
      $region134: #{tpu_custom_call.1} parent=129 // pred_check_branch
        %341 = sbr.rel (%p339) target = $region136
      $region135: #{tpu_custom_call.1} parent=129 // pred_region
        %s342 = ssub.s32 1, %s331
        %s343 = sadd.s32 %s305, %s337
        %s344 = sld [smem:[#allocation4 + %s343]]
        %s345 = smul.addr %s344, 16
        %s346 = scalar_lea.hbm %s3, %s345
        %s347 = scalar_lea.vmem [#allocation2], %s342
        %s348 = scalar_lea.sflag [#allocation3], %s342
        // Predicated region
        $region137: #{tpu_custom_call.1} parent=135 // pred_check
          _
        $region138: #{tpu_custom_call.1} parent=135 // pred_check_branch
          %350 = sbr.rel target = $region140
        $region139: #{tpu_custom_call.1} parent=135 // pred_region
          %351 = sst [smem:[#allocation14]] [#allocation33]
          %352 = sst [smem:[#allocation15]] [#allocation32]
        $region140: #{tpu_custom_call.1} parent=135 // pred_fallthru
          _
        %354 = shalt.err (0)
        %s356 = sshll.u32 %s347, 4
        %s357 = int_to_ptr.vmem [resolvable:$true] %s356
        %359 = dma.hbm_to_vmem [thread:$0]  %s346, 16, %s357, %s348
      $region136: #{tpu_custom_call.1} parent=129 // pred_fallthru
        _
      %v360 = vld [vmem:[%s332] sm:$0x1]
      %v361 = vadd.f32 %v330, %v360
    $region130: #{tpu_custom_call.1} parent=1 // loop_footer
      %s327 = sadd.s32 %s325, 1
    $region131: #{tpu_custom_call.1} parent=1 // loop_footer_branch
      %324 = sbr.rel target = $region127
    $region132: #{tpu_custom_call.1} parent=1 // loop_exit
      _
    %s362 = sld [smem:[#allocation9 + %s303]]
    %v363 = vstv %s362
    %v364 = vmul.f32 %v330, %v363
    %365 = vst [vmem:[#allocation11 + $0x4] sm:$0x1] %v364
    %s366 = sadd.s32 %s51, 5
    %s367 = sld [smem:[#allocation8 + %s366]]
    %s368 = smul.u32 %s366, 4
    %p369 = scmp.gt.s32.totalorder %s367, 0
    // Predicated region
    $region141: #{tpu_custom_call.1} parent=1 // pred_check
      %p370 = pneg %p369
    $region142: #{tpu_custom_call.1} parent=1 // pred_check_branch
      %372 = sbr.rel (%p370) target = $region144
    $region143: #{tpu_custom_call.1} parent=1 // pred_region
      %s373 = sld [smem:[#allocation4 + %s368]]
      %s374 = smul.addr %s373, 16
      %s375 = scalar_lea.hbm %s3, %s374
      // Predicated region
      $region145: #{tpu_custom_call.1} parent=143 // pred_check
        _
      $region146: #{tpu_custom_call.1} parent=143 // pred_check_branch
        %377 = sbr.rel target = $region148
      $region147: #{tpu_custom_call.1} parent=143 // pred_region
        %378 = sst [smem:[#allocation14]] [#allocation35]
        %379 = sst [smem:[#allocation15]] [#allocation34]
      $region148: #{tpu_custom_call.1} parent=143 // pred_fallthru
        _
      %381 = shalt.err (0)
      %s383 = sshll.u32 [#allocation2], 4
      %s384 = int_to_ptr.vmem [resolvable:$true] %s383
      %386 = dma.hbm_to_vmem [thread:$0]  %s375, 16, %s384, [#allocation3]
    $region144: #{tpu_custom_call.1} parent=1 // pred_fallthru
      _
    // While loop
    $region149: #{tpu_custom_call.1} parent=1 // loop_pre_header
      _
    $region150: #{tpu_custom_call.1} parent=1 // loop_header
      %s388 = sphi 0, %s390
      %p389 = scmp.ge.s32.totalorder %s388, %s367
      %v393 = vphi 0.0, %v424
    $region151: #{tpu_custom_call.1} parent=1 // loop_header_branch
      %392 = sbr.rel (%p389) target = $region155
    $region152: #{tpu_custom_call.1} parent=1 // loop_body
      %s394 = sand.u32 %s388, 1
      %s395 = scalar_lea.vmem [#allocation2], %s394
      %s396 = scalar_lea.sflag [#allocation3], %s394
      %s397 = smul.u32 1, 1
      %s398 = sshll.u32 %s397, 4
      %399 = dma.done %s396, %s398
      %s400 = sadd.s32 %s388, 1
      %p401 = scmp.lt.s32.totalorder %s400, %s367
      // Predicated region
      $region156: #{tpu_custom_call.1} parent=152 // pred_check
        %p402 = pneg %p401
      $region157: #{tpu_custom_call.1} parent=152 // pred_check_branch
        %404 = sbr.rel (%p402) target = $region159
      $region158: #{tpu_custom_call.1} parent=152 // pred_region
        %s405 = ssub.s32 1, %s394
        %s406 = sadd.s32 %s368, %s400
        %s407 = sld [smem:[#allocation4 + %s406]]
        %s408 = smul.addr %s407, 16
        %s409 = scalar_lea.hbm %s3, %s408
        %s410 = scalar_lea.vmem [#allocation2], %s405
        %s411 = scalar_lea.sflag [#allocation3], %s405
        // Predicated region
        $region160: #{tpu_custom_call.1} parent=158 // pred_check
          _
        $region161: #{tpu_custom_call.1} parent=158 // pred_check_branch
          %413 = sbr.rel target = $region163
        $region162: #{tpu_custom_call.1} parent=158 // pred_region
          %414 = sst [smem:[#allocation14]] [#allocation37]
          %415 = sst [smem:[#allocation15]] [#allocation36]
        $region163: #{tpu_custom_call.1} parent=158 // pred_fallthru
          _
        %417 = shalt.err (0)
        %s419 = sshll.u32 %s410, 4
        %s420 = int_to_ptr.vmem [resolvable:$true] %s419
        %422 = dma.hbm_to_vmem [thread:$0]  %s409, 16, %s420, %s411
      $region159: #{tpu_custom_call.1} parent=152 // pred_fallthru
        _
      %v423 = vld [vmem:[%s395] sm:$0x1]
      %v424 = vadd.f32 %v393, %v423
    $region153: #{tpu_custom_call.1} parent=1 // loop_footer
      %s390 = sadd.s32 %s388, 1
    $region154: #{tpu_custom_call.1} parent=1 // loop_footer_branch
      %387 = sbr.rel target = $region150
    $region155: #{tpu_custom_call.1} parent=1 // loop_exit
      _
    %s425 = sld [smem:[#allocation9 + %s366]]
    %v426 = vstv %s425
    %v427 = vmul.f32 %v393, %v426
    %428 = vst [vmem:[#allocation11 + $0x5] sm:$0x1] %v427
    %s429 = sadd.s32 %s51, 6
    %s430 = sld [smem:[#allocation8 + %s429]]
    %s431 = smul.u32 %s429, 4
    %p432 = scmp.gt.s32.totalorder %s430, 0
    // Predicated region
    $region164: #{tpu_custom_call.1} parent=1 // pred_check
      %p433 = pneg %p432
    $region165: #{tpu_custom_call.1} parent=1 // pred_check_branch
      %435 = sbr.rel (%p433) target = $region167
    $region166: #{tpu_custom_call.1} parent=1 // pred_region
      %s436 = sld [smem:[#allocation4 + %s431]]
      %s437 = smul.addr %s436, 16
      %s438 = scalar_lea.hbm %s3, %s437
      // Predicated region
      $region168: #{tpu_custom_call.1} parent=166 // pred_check
        _
      $region169: #{tpu_custom_call.1} parent=166 // pred_check_branch
        %440 = sbr.rel target = $region171
      $region170: #{tpu_custom_call.1} parent=166 // pred_region
        %441 = sst [smem:[#allocation14]] [#allocation39]
        %442 = sst [smem:[#allocation15]] [#allocation38]
      $region171: #{tpu_custom_call.1} parent=166 // pred_fallthru
        _
      %444 = shalt.err (0)
      %s446 = sshll.u32 [#allocation2], 4
      %s447 = int_to_ptr.vmem [resolvable:$true] %s446
      %449 = dma.hbm_to_vmem [thread:$0]  %s438, 16, %s447, [#allocation3]
    $region167: #{tpu_custom_call.1} parent=1 // pred_fallthru
      _
    // While loop
    $region172: #{tpu_custom_call.1} parent=1 // loop_pre_header
      _
    $region173: #{tpu_custom_call.1} parent=1 // loop_header
      %s451 = sphi 0, %s453
      %p452 = scmp.ge.s32.totalorder %s451, %s430
      %v456 = vphi 0.0, %v487
    $region174: #{tpu_custom_call.1} parent=1 // loop_header_branch
      %455 = sbr.rel (%p452) target = $region178
    $region175: #{tpu_custom_call.1} parent=1 // loop_body
      %s457 = sand.u32 %s451, 1
      %s458 = scalar_lea.vmem [#allocation2], %s457
      %s459 = scalar_lea.sflag [#allocation3], %s457
      %s460 = smul.u32 1, 1
      %s461 = sshll.u32 %s460, 4
      %462 = dma.done %s459, %s461
      %s463 = sadd.s32 %s451, 1
      %p464 = scmp.lt.s32.totalorder %s463, %s430
      // Predicated region
      $region179: #{tpu_custom_call.1} parent=175 // pred_check
        %p465 = pneg %p464
      $region180: #{tpu_custom_call.1} parent=175 // pred_check_branch
        %467 = sbr.rel (%p465) target = $region182
      $region181: #{tpu_custom_call.1} parent=175 // pred_region
        %s468 = ssub.s32 1, %s457
        %s469 = sadd.s32 %s431, %s463
        %s470 = sld [smem:[#allocation4 + %s469]]
        %s471 = smul.addr %s470, 16
        %s472 = scalar_lea.hbm %s3, %s471
        %s473 = scalar_lea.vmem [#allocation2], %s468
        %s474 = scalar_lea.sflag [#allocation3], %s468
        // Predicated region
        $region183: #{tpu_custom_call.1} parent=181 // pred_check
          _
        $region184: #{tpu_custom_call.1} parent=181 // pred_check_branch
          %476 = sbr.rel target = $region186
        $region185: #{tpu_custom_call.1} parent=181 // pred_region
          %477 = sst [smem:[#allocation14]] [#allocation41]
          %478 = sst [smem:[#allocation15]] [#allocation40]
        $region186: #{tpu_custom_call.1} parent=181 // pred_fallthru
          _
        %480 = shalt.err (0)
        %s482 = sshll.u32 %s473, 4
        %s483 = int_to_ptr.vmem [resolvable:$true] %s482
        %485 = dma.hbm_to_vmem [thread:$0]  %s472, 16, %s483, %s474
      $region182: #{tpu_custom_call.1} parent=175 // pred_fallthru
        _
      %v486 = vld [vmem:[%s458] sm:$0x1]
      %v487 = vadd.f32 %v456, %v486
    $region176: #{tpu_custom_call.1} parent=1 // loop_footer
      %s453 = sadd.s32 %s451, 1
    $region177: #{tpu_custom_call.1} parent=1 // loop_footer_branch
      %450 = sbr.rel target = $region173
    $region178: #{tpu_custom_call.1} parent=1 // loop_exit
      _
    %s488 = sld [smem:[#allocation9 + %s429]]
    %v489 = vstv %s488
    %v490 = vmul.f32 %v456, %v489
    %491 = vst [vmem:[#allocation11 + $0x6] sm:$0x1] %v490
    %s492 = sadd.s32 %s51, 7
    %s493 = sld [smem:[#allocation8 + %s492]]
    %s494 = smul.u32 %s492, 4
    %p495 = scmp.gt.s32.totalorder %s493, 0
    // Predicated region
    $region187: #{tpu_custom_call.1} parent=1 // pred_check
      %p496 = pneg %p495
    $region188: #{tpu_custom_call.1} parent=1 // pred_check_branch
      %498 = sbr.rel (%p496) target = $region190
    $region189: #{tpu_custom_call.1} parent=1 // pred_region
      %s499 = sld [smem:[#allocation4 + %s494]]
      %s500 = smul.addr %s499, 16
      %s501 = scalar_lea.hbm %s3, %s500
      // Predicated region
      $region191: #{tpu_custom_call.1} parent=189 // pred_check
        _
      $region192: #{tpu_custom_call.1} parent=189 // pred_check_branch
        %503 = sbr.rel target = $region194
      $region193: #{tpu_custom_call.1} parent=189 // pred_region
        %504 = sst [smem:[#allocation14]] [#allocation43]
        %505 = sst [smem:[#allocation15]] [#allocation42]
      $region194: #{tpu_custom_call.1} parent=189 // pred_fallthru
        _
      %507 = shalt.err (0)
      %s509 = sshll.u32 [#allocation2], 4
      %s510 = int_to_ptr.vmem [resolvable:$true] %s509
      %512 = dma.hbm_to_vmem [thread:$0]  %s501, 16, %s510, [#allocation3]
    $region190: #{tpu_custom_call.1} parent=1 // pred_fallthru
      _
    // While loop
    $region195: #{tpu_custom_call.1} parent=1 // loop_pre_header
      _
    $region196: #{tpu_custom_call.1} parent=1 // loop_header
      %s514 = sphi 0, %s516
      %p515 = scmp.ge.s32.totalorder %s514, %s493
      %v519 = vphi 0.0, %v550
    $region197: #{tpu_custom_call.1} parent=1 // loop_header_branch
      %518 = sbr.rel (%p515) target = $region201
    $region198: #{tpu_custom_call.1} parent=1 // loop_body
      %s520 = sand.u32 %s514, 1
      %s521 = scalar_lea.vmem [#allocation2], %s520
      %s522 = scalar_lea.sflag [#allocation3], %s520
      %s523 = smul.u32 1, 1
      %s524 = sshll.u32 %s523, 4
      %525 = dma.done %s522, %s524
      %s526 = sadd.s32 %s514, 1
      %p527 = scmp.lt.s32.totalorder %s526, %s493
      // Predicated region
      $region202: #{tpu_custom_call.1} parent=198 // pred_check
        %p528 = pneg %p527
      $region203: #{tpu_custom_call.1} parent=198 // pred_check_branch
        %530 = sbr.rel (%p528) target = $region205
      $region204: #{tpu_custom_call.1} parent=198 // pred_region
        %s531 = ssub.s32 1, %s520
        %s532 = sadd.s32 %s494, %s526
        %s533 = sld [smem:[#allocation4 + %s532]]
        %s534 = smul.addr %s533, 16
        %s535 = scalar_lea.hbm %s3, %s534
        %s536 = scalar_lea.vmem [#allocation2], %s531
        %s537 = scalar_lea.sflag [#allocation3], %s531
        // Predicated region
        $region206: #{tpu_custom_call.1} parent=204 // pred_check
          _
        $region207: #{tpu_custom_call.1} parent=204 // pred_check_branch
          %539 = sbr.rel target = $region209
        $region208: #{tpu_custom_call.1} parent=204 // pred_region
          %540 = sst [smem:[#allocation14]] [#allocation45]
          %541 = sst [smem:[#allocation15]] [#allocation44]
        $region209: #{tpu_custom_call.1} parent=204 // pred_fallthru
          _
        %543 = shalt.err (0)
        %s545 = sshll.u32 %s536, 4
        %s546 = int_to_ptr.vmem [resolvable:$true] %s545
        %548 = dma.hbm_to_vmem [thread:$0]  %s535, 16, %s546, %s537
      $region205: #{tpu_custom_call.1} parent=198 // pred_fallthru
        _
      %v549 = vld [vmem:[%s521] sm:$0x1]
      %v550 = vadd.f32 %v519, %v549
    $region199: #{tpu_custom_call.1} parent=1 // loop_footer
      %s516 = sadd.s32 %s514, 1
    $region200: #{tpu_custom_call.1} parent=1 // loop_footer_branch
      %513 = sbr.rel target = $region196
    $region201: #{tpu_custom_call.1} parent=1 // loop_exit
      _
    %s551 = sld [smem:[#allocation9 + %s492]]
    %v552 = vstv %s551
    %v553 = vmul.f32 %v519, %v552
    %554 = vst [vmem:[#allocation11 + $0x7] sm:$0x1] %v553
    // Predicated region
    $region210: #{tpu_custom_call.1} parent=1 // pred_check
      _
    $region211: #{tpu_custom_call.1} parent=1 // pred_check_branch
      %556 = sbr.rel (0) target = $region213
    $region212: #{tpu_custom_call.1} parent=1 // pred_region
      %s558 = ssub.s32 128, 128
      %559 = vsyncadd [#allocation5], %s558
      %s561 = sshll.u32 [#allocation11], 4
      %s562 = int_to_ptr.vmem [resolvable:$true] %s561
      %564 = dma.vmem_to_hbm [thread:$0]  %s562, 128, %s4, [#allocation5]
    $region213: #{tpu_custom_call.1} parent=1 // pred_fallthru
      _
    // Predicated region
    $region214: #{tpu_custom_call.1} parent=1 // pred_check
      _
    $region215: #{tpu_custom_call.1} parent=1 // pred_check_branch
      %566 = sbr.rel (0) target = $region217
    $region216: #{tpu_custom_call.1} parent=1 // pred_region
      %567 = dma.done [#allocation5], 128
    $region217: #{tpu_custom_call.1} parent=1 // pred_fallthru
      _
    %568 = vsyncpa [#allocation5], 1
    %569 = vsyncpa [#allocation6], 1
    %570 = vsyncpa [#allocation7], 1
    %571 = vsyncpa [#allocation10], 1
  %572 = vsyncmov [#allocation3]
  %s573 = vpop.sfrf %572
  %p574 = scmp.eq.s32.totalorder %s573, 0
  %p575 = pneg %p574
  %577 = shalt.err (%p575)
  %s578 = scalar_lea.sflag [#allocation3], 1
  %579 = vsyncmov %s578
  %s580 = vpop.sfrf %579
  %p581 = scmp.eq.s32.totalorder %s580, 0
  %p582 = pneg %p581
  %584 = shalt.err (%p582)

</llo_original>
